<compile_context>
chip_gen: v7x
topology: tpu7x:2x2x1
jax: 0.10.0
libtpu: 0.0.40
codegen_flags: <defaults>
</compile_context>

<pallas_src>
import functools

import jax
import jax.numpy as jnp
from jax.experimental import pallas as pl
from jax.experimental.pallas import tpu as pltpu

F32 = jnp.float32
BF16 = jnp.bfloat16


# --------------------------------------------------------------------------
# Tiling helper: largest M-tile (multiple of 8, up to 1024) that divides M.
# --------------------------------------------------------------------------
def _pick_tm(M, cap=1024):
    for tm in (1024, 512, 256, 128, 64, 32, 16, 8):
        if tm <= cap and M % tm == 0:
            return tm
    return M  # full extent (always legal: equals the full dim)


# --------------------------------------------------------------------------
# Kernel 1: matmul with fused BN+ReLU epilogue  (used for conv0+norm0+relu0)
# --------------------------------------------------------------------------
def _matmul_bn_relu_kernel(a_ref, w_ref, s_ref, b_ref, o_ref):
    y = jnp.dot(a_ref[...], w_ref[...], preferred_element_type=jnp.float32)
    o_ref[...] = jnp.maximum(y * s_ref[...] + b_ref[...], 0.0).astype(o_ref.dtype)


def matmul_bn_relu(a, w, scale, bias):
    """a: (M, K) bf16, w: (K, N) bf16, scale/bias: (1, N) f32 -> (M, N) bf16."""
    M, K = a.shape
    N = w.shape[1]
    tm = _pick_tm(M)
    return pl.pallas_call(
        _matmul_bn_relu_kernel,
        out_shape=jax.ShapeDtypeStruct((M, N), BF16),
        grid=(M // tm,),
        in_specs=[
            pl.BlockSpec((tm, K), lambda i: (i, 0)),
            pl.BlockSpec((K, N), lambda i: (0, 0)),
            pl.BlockSpec((1, N), lambda i: (0, 0)),
            pl.BlockSpec((1, N), lambda i: (0, 0)),
        ],
        out_specs=pl.BlockSpec((tm, N), lambda i: (i, 0)),
        compiler_params=pltpu.CompilerParams(dimension_semantics=("parallel",)),
    )(a, w, scale, bias)


# --------------------------------------------------------------------------
# Kernel 2: fully fused dense layer
#   BN+ReLU -> 1x1 conv -> BN+ReLU -> 3x3 conv (pad 1, 9 tap matmuls over a
#   zero-padded VMEM scratch) -> concat([x, new_features]) written directly.
# --------------------------------------------------------------------------
def _dense_layer_kernel(H, W, C, Cb, G,
                        x_ref, s1_ref, b1_ref, w1_ref, s2_ref, b2_ref, w2_ref,
                        o_ref, pad_ref):
    x = x_ref[0]                                            # (H, W, C) bf16
    x2d = x.reshape(H * W, C).astype(jnp.float32)
    a1 = jnp.maximum(x2d * s1_ref[...] + b1_ref[...], 0.0)  # BN1 + ReLU (f32)
    y1 = jnp.dot(a1.astype(BF16), w1_ref[...],
                 preferred_element_type=jnp.float32)        # 1x1 conv -> (H*W, Cb)
    a2 = jnp.maximum(y1 * s2_ref[...] + b2_ref[...], 0.0).astype(BF16)

    # Zero-padded activation in VMEM for the 3x3 conv (padding=1).
    pad_ref[...] = jnp.zeros((H + 2, W + 2, Cb), BF16)
    pad_ref[1:H + 1, 1:W + 1, :] = a2.reshape(H, W, Cb)

    # 3x3 conv as 9 shifted, accumulating matmuls (f32 accumulator).
    acc = jnp.zeros((H * W, G), jnp.float32)
    for t in range(9):
        i, j = t // 3, t % 3
        win = pad_ref[i:i + H, j:j + W, :]                  # (H, W, Cb)
        acc = acc + jnp.dot(win.reshape(H * W, Cb), w2_ref[t],
                            preferred_element_type=jnp.float32)
    y2 = acc.reshape(H, W, G).astype(x.dtype)

    # drop_rate == 0 -> dropout is identity.  Fused channel concat.
    o_ref[0] = jnp.concatenate([x, y2], axis=-1)


def dense_layer(x, lp):
    N, H, W, C = x.shape
    Cb = lp["conv1_w"].shape[1]
    G = lp["conv2_w"].shape[-1]
    kernel = functools.partial(_dense_layer_kernel, H, W, C, Cb, G)
    return pl.pallas_call(
        kernel,
        out_shape=jax.ShapeDtypeStruct((N, H, W, C + G), BF16),
        grid=(N,),
        in_specs=[
            pl.BlockSpec((1, H, W, C), lambda n: (n, 0, 0, 0)),
            pl.BlockSpec((1, C), lambda n: (0, 0)),
            pl.BlockSpec((1, C), lambda n: (0, 0)),
            pl.BlockSpec((C, Cb), lambda n: (0, 0)),
            pl.BlockSpec((1, Cb), lambda n: (0, 0)),
            pl.BlockSpec((1, Cb), lambda n: (0, 0)),
            pl.BlockSpec((9, Cb, G), lambda n: (0, 0, 0)),
        ],
        out_specs=pl.BlockSpec((1, H, W, C + G), lambda n: (n, 0, 0, 0)),
        scratch_shapes=[pltpu.VMEM((H + 2, W + 2, Cb), BF16)],
        compiler_params=pltpu.CompilerParams(dimension_semantics=("parallel",)),
    )(x, lp["n1_s"], lp["n1_b"], lp["conv1_w"], lp["n2_s"], lp["n2_b"], lp["conv2_w"])


# --------------------------------------------------------------------------
# Kernel 3: fully fused transition
#   BN+ReLU -> 2x2 avg pool (pooling-matrix matmul) -> 1x1 conv.
#   (Pooling before the 1x1 conv is identical to conv-then-pool: both linear.)
# --------------------------------------------------------------------------
def _transition_kernel(H, W, C, Cout,
                       x_ref, s_ref, b_ref, w_ref, p_ref, o_ref):
    Hh, Wh = H // 2, W // 2
    x2d = x_ref[0].reshape(H * W, C).astype(jnp.float32)
    a = jnp.maximum(x2d * s_ref[...] + b_ref[...], 0.0)          # BN + ReLU
    pooled = jnp.dot(p_ref[...], a.astype(BF16),
                     preferred_element_type=jnp.float32)         # (Hh*Wh, C)
    y = jnp.dot(pooled.astype(BF16), w_ref[...],
                preferred_element_type=jnp.float32)              # (Hh*Wh, Cout)
    o_ref[0] = y.reshape(Hh, Wh, Cout).astype(o_ref.dtype)


def _pool_matrix(H, W):
    """(Hh*Wh, H*W) matrix performing a 2x2/stride-2 average pool on flattened HW."""
    Hh, Wh = H // 2, W // 2
    idx = jnp.arange(Hh * Wh)
    ph, pw = idx // Wh, idx % Wh
    P = jnp.zeros((Hh * Wh, H * W), F32)
    for di in range(2):
        for dj in range(2):
            cols = (2 * ph + di) * W + (2 * pw + dj)
            P = P + jax.nn.one_hot(cols, H * W, dtype=F32)
    return (0.25 * P).astype(BF16)


def transition(x, tp):
    N, H, W, C = x.shape
    Cout = tp["conv_w"].shape[1]
    Hh, Wh = H // 2, W // 2
    P = _pool_matrix(H, W)
    kernel = functools.partial(_transition_kernel, H, W, C, Cout)
    return pl.pallas_call(
        kernel,
        out_shape=jax.ShapeDtypeStruct((N, Hh, Wh, Cout), BF16),
        grid=(N,),
        in_specs=[
            pl.BlockSpec((1, H, W, C), lambda n: (n, 0, 0, 0)),
            pl.BlockSpec((1, C), lambda n: (0, 0)),
            pl.BlockSpec((1, C), lambda n: (0, 0)),
            pl.BlockSpec((C, Cout), lambda n: (0, 0)),
            pl.BlockSpec((Hh * Wh, H * W), lambda n: (0, 0)),
        ],
        out_specs=pl.BlockSpec((1, Hh, Wh, Cout), lambda n: (n, 0, 0, 0)),
        compiler_params=pltpu.CompilerParams(dimension_semantics=("parallel",)),
    )(x, tp["n_s"], tp["n_b"], tp["conv_w"], P)


# --------------------------------------------------------------------------
# Kernel 4: head = norm5 -> relu -> global avg pool -> concat(otherfea) -> linear
# (concat + linear expressed as a split matmul; dead branch dropped at trace time)
# --------------------------------------------------------------------------
def _head_kernel(added_weight, f_ref, s_ref, b_ref, other_ref, wf_ref, wo_ref,
                 cb_ref, o_ref):
    f = f_ref[...].astype(jnp.float32)                       # (N, H, W, C)
    a = jnp.maximum(f * s_ref[...] + b_ref[...], 0.0)
    inv_hw = 1.0 / (f.shape[1] * f.shape[2])
    pooled = jnp.sum(jnp.sum(a, axis=2), axis=1) * inv_hw    # (N, C)
    out = jnp.dot(pooled, wf_ref[...], preferred_element_type=jnp.float32) + cb_ref[...]
    if added_weight != 0.0:   # python constant -> dead matmul removed when 0
        out = out + jnp.dot(other_ref[...] * added_weight, wo_ref[...],
                            preferred_element_type=jnp.float32)
    o_ref[...] = out


def head(features, norm5_s, norm5_b, otherfea, wf, wo, cb, added_weight):
    N = features.shape[0]
    ncls = cb.shape[-1]
    kernel = functools.partial(_head_kernel, float(added_weight))
    return pl.pallas_call(
        kernel,
        out_shape=jax.ShapeDtypeStruct((N, ncls), F32),
    )(features, norm5_s, norm5_b, otherfea, wf, wo, cb)


# --------------------------------------------------------------------------
# Pure-JAX glue (runs once on the tiny 3-channel stem; index manipulation only)
# TODO(synk): conv0 could also be tap-accumulated in-kernel and the 3x3 maxpool
# fused as its epilogue; left as JAX glue since it runs once on a 3-channel input.
# --------------------------------------------------------------------------
def im2col(x, kh, kw, stride, pad):
    """x: (N, H, W, C) -> (N, Ho, Wo, kh*kw*C), patch order (kh, kw, C)."""
    N, H, W, C = x.shape
    xp = jnp.pad(x, ((0, 0), (pad, pad), (pad, pad), (0, 0)))
    Ho = (H + 2 * pad - kh) // stride + 1
    Wo = (W + 2 * pad - kw) // stride + 1
    cols = []
    for i in range(kh):
        for j in range(kw):
            cols.append(xp[:, i:i + stride * (Ho - 1) + 1:stride,
                            j:j + stride * (Wo - 1) + 1:stride, :])
    return jnp.concatenate(cols, axis=-1)


def maxpool3x3_s2_p1(x):
    """MaxPool2d(kernel_size=3, stride=2, padding=1), NHWC."""
    N, H, W, C = x.shape
    neg = jnp.finfo(x.dtype).min
    xp = jnp.pad(x, ((0, 0), (1, 1), (1, 1), (0, 0)), constant_values=neg)
    Ho = (H + 2 - 3) // 2 + 1
    Wo = (W + 2 - 3) // 2 + 1
    out = None
    for i in range(3):
        for j in range(3):
            s = xp[:, i:i + 2 * (Ho - 1) + 1:2, j:j + 2 * (Wo - 1) + 1:2, :]
            out = s if out is None else jnp.maximum(out, s)
    return out


# --------------------------------------------------------------------------
# Parameter initialization (deterministic, synthetic)
# --------------------------------------------------------------------------
def _bn_affine(key, c):
    k1, k2, k3, k4 = jax.random.split(key, 4)
    gamma = 1.0 + 0.1 * jax.random.normal(k1, (c,), F32)
    beta = 0.1 * jax.random.normal(k2, (c,), F32)
    mean = 0.1 * jax.random.normal(k3, (c,), F32)
    var = 1.0 + 0.1 * jax.random.uniform(k4, (c,), F32)
    eps = 1e-5
    scale = gamma / jnp.sqrt(var + eps)
    bias = beta - mean * scale
    return scale.reshape(1, c), bias.reshape(1, c)


def _conv_w_2d(key, kh, kw, cin, cout):
    fan_in = kh * kw * cin
    w = jax.random.normal(key, (kh, kw, cin, cout), F32) * (2.0 / fan_in) ** 0.5
    return w.reshape(kh * kw * cin, cout).astype(BF16)


def _conv_w_taps(key, kh, kw, cin, cout):
    fan_in = kh * kw * cin
    w = jax.random.normal(key, (kh, kw, cin, cout), F32) * (2.0 / fan_in) ** 0.5
    return w.reshape(kh * kw, cin, cout).astype(BF16)


def init_params(key, cfg):
    kit = iter(jax.random.split(key, 256))
    g = cfg["growth_rate"]
    bs = cfg["bn_size"]
    p = {}
    nf = cfg["num_init_features"]
    p["conv0_w"] = _conv_w_2d(next(kit), 7, 7, 3, nf)            # (147, nf) bf16
    p["norm0_s"], p["norm0_b"] = _bn_affine(next(kit), nf)
    blocks, transitions = [], []
    for bi, nl in enumerate(cfg["block_config"]):
        layers = []
        for li in range(nl):
            cin = nf + li * g
            lp = {}
            lp["n1_s"], lp["n1_b"] = _bn_affine(next(kit), cin)
            lp["conv1_w"] = _conv_w_2d(next(kit), 1, 1, cin, bs * g)   # (cin, bs*g)
            lp["n2_s"], lp["n2_b"] = _bn_affine(next(kit), bs * g)
            lp["conv2_w"] = _conv_w_taps(next(kit), 3, 3, bs * g, g)   # (9, bs*g, g)
            layers.append(lp)
        blocks.append(layers)
        nf = nf + nl * g
        if bi != len(cfg["block_config"]) - 1:
            cout = int(nf * cfg["compression"])
            tp = {}
            tp["n_s"], tp["n_b"] = _bn_affine(next(kit), nf)
            tp["conv_w"] = _conv_w_2d(next(kit), 1, 1, nf, cout)       # (nf, cout)
            transitions.append(tp)
            nf = cout
    p["blocks"] = blocks
    p["transitions"] = transitions
    p["norm5_s"], p["norm5_b"] = _bn_affine(next(kit), nf)
    cin_cls = nf + cfg["otherfea_shape"]
    w = jax.random.normal(next(kit), (cfg["num_classes"], cin_cls), F32) / (cin_cls ** 0.5)
    b = 0.01 * jax.random.normal(next(kit), (cfg["num_classes"],), F32)
    p["cls_wf"] = jnp.transpose(w[:, :nf])                  # (C, num_classes) f32
    p["cls_wo"] = jnp.transpose(w[:, nf:])                  # (otherfea, num_classes)
    p["cls_b"] = b.reshape(1, -1)
    p["num_features"] = nf
    return p


# --------------------------------------------------------------------------
# Forward pass
# --------------------------------------------------------------------------
def densenet_forward(params, x_nchw, otherfea, cfg):
    x = jnp.transpose(x_nchw.astype(F32), (0, 2, 3, 1))      # NCHW -> NHWC
    # conv0 (7x7 s2 p3, no bias) with fused norm0+relu0 epilogue
    patches = im2col(x, 7, 7, 2, 3)
    N, Ho, Wo, KC = patches.shape
    y = matmul_bn_relu(patches.reshape(N * Ho * Wo, KC).astype(BF16),
                       params["conv0_w"], params["norm0_s"], params["norm0_b"])
    y = y.reshape(N, Ho, Wo, -1)
    # pool0: maxpool 3x3 stride 2 pad 1
    y = maxpool3x3_s2_p1(y)
    # dense blocks + transitions (each layer / transition = one fused kernel)
    for bi, nl in enumerate(cfg["block_config"]):
        for li in range(nl):
            y = dense_layer(y, params["blocks"][bi][li])
        if bi != len(cfg["block_config"]) - 1:
            y = transition(y, params["transitions"][bi])
    # head: norm5 -> relu -> avg_pool(avgpool_size == final spatial) -> concat -> linear
    other = otherfea.reshape(y.shape[0], -1).astype(F32)
    return head(y, params["norm5_s"], params["norm5_b"], other,
                params["cls_wf"], params["cls_wo"], params["cls_b"],
                cfg["added_weight"])


# --------------------------------------------------------------------------
if __name__ == "__main__":
    cfg = dict(
        growth_rate=8,
        block_config=(2, 2),
        compression=0.5,
        num_init_features=16,
        bn_size=2,
        num_classes=10,
        otherfea_shape=9,
        avgpool_size=8,        # == final spatial size (64 -> /2 -> /2 -> /2 = 8)
        added_weight=0.0,      # module default
    )
    key = jax.random.PRNGKey(0)
    kp, kx, ko = jax.random.split(key, 3)
    params = init_params(kp, cfg)
    x = jax.random.normal(kx, (2, 3, 64, 64), F32)           # NCHW, like PyTorch input
    otherfea = jax.random.normal(ko, (2, cfg["otherfea_shape"]), F32)

    out = densenet_forward(params, x, otherfea, cfg)
    out = jax.block_until_ready(out)
    assert out.shape == (2, cfg["num_classes"]), out.shape
    assert bool(jnp.all(jnp.isfinite(out)))
    print("KERNEL_OK")
</pallas_src>

<mosaic_0001>
module attributes {stable_mosaic.version = 11 : i64} {
  func.func @_matmul_bn_relu_kernel(%arg0: i32, %arg1: memref<1024x147xbf16, #tpu.memory_space<vmem>>, %arg2: memref<147x16xbf16, #tpu.memory_space<vmem>>, %arg3: memref<1x16xf32, #tpu.memory_space<vmem>>, %arg4: memref<1x16xf32, #tpu.memory_space<vmem>>, %arg5: memref<1024x16xbf16, #tpu.memory_space<vmem>>) attributes {dimension_semantics = [#tpu.dimension_semantics<parallel>], iteration_bounds = array<i64: 2>, scalar_prefetch = 0 : i64, scratch_operands = 0 : i64, tpu.core_type = #tpu.core_type<tc>, window_params = [{transform_indices = @transform_0, window_bounds = array<i64: 1024, 147>}, {pipeline_mode = #tpu.pipeline_mode<synchronous>, transform_indices = @transform_1, window_bounds = array<i64: 147, 16>}, {pipeline_mode = #tpu.pipeline_mode<synchronous>, transform_indices = @transform_2, window_bounds = array<i64: 1, 16>}, {pipeline_mode = #tpu.pipeline_mode<synchronous>, transform_indices = @transform_3, window_bounds = array<i64: 1, 16>}, {transform_indices = @transform_4, window_bounds = array<i64: 1024, 16>}]} {
    %c0 = arith.constant 0 : index
    %c0_0 = arith.constant 0 : index
    %0 = vector.load %arg1[%c0, %c0_0] : memref<1024x147xbf16, #tpu.memory_space<vmem>>, vector<1024x147xbf16>
    %c0_1 = arith.constant 0 : index
    %c0_2 = arith.constant 0 : index
    %1 = vector.load %arg2[%c0_1, %c0_2] : memref<147x16xbf16, #tpu.memory_space<vmem>>, vector<147x16xbf16>
    %cst = arith.constant dense<0.000000e+00> : vector<1024x16xf32>
    %2 = tpu.matmul %0, %1, %cst {dimension_numbers = #tpu.dot_dimension_numbers<[1], [0], [0], [1], [0, 0, 1, 1], [], []>} : vector<1024x147xbf16>, vector<147x16xbf16>, vector<1024x16xf32> -> vector<1024x16xf32>
    %c0_3 = arith.constant 0 : index
    %c0_4 = arith.constant 0 : index
    %3 = vector.load %arg3[%c0_3, %c0_4] : memref<1x16xf32, #tpu.memory_space<vmem>>, vector<1x16xf32>
    %4 = vector.broadcast %3 : vector<1x16xf32> to vector<1024x16xf32>
    %5 = arith.mulf %2, %4 : vector<1024x16xf32>
    %c0_5 = arith.constant 0 : index
    %c0_6 = arith.constant 0 : index
    %6 = vector.load %arg4[%c0_5, %c0_6] : memref<1x16xf32, #tpu.memory_space<vmem>>, vector<1x16xf32>
    %7 = vector.broadcast %6 : vector<1x16xf32> to vector<1024x16xf32>
    %8 = arith.addf %5, %7 : vector<1024x16xf32>
    %cst_7 = arith.constant 0.000000e+00 : f32
    %9 = vector.broadcast %cst_7 : f32 to vector<1024x16xf32>
    %10 = arith.maximumf %8, %9 : vector<1024x16xf32>
    %11 = arith.truncf %10 : vector<1024x16xf32> to vector<1024x16xbf16>
    %c0_8 = arith.constant 0 : index
    %c0_9 = arith.constant 0 : index
    %12 = vector.load %arg5[%c0_8, %c0_9] : memref<1024x16xbf16, #tpu.memory_space<vmem>>, vector<1024x16xbf16>
    tpu.vector_store %arg5[%c0_8, %c0_9], %11 {strides = array<i32>} : memref<1024x16xbf16, #tpu.memory_space<vmem>>, vector<1024x16xbf16>,
    return
  }
  func.func @transform_0(%arg0: i32) -> (i32, i32) {
    %c0_i32 = arith.constant 0 : i32
    %c0_i32_0 = arith.constant 0 : i32
    return %arg0, %c0_i32 : i32, i32
  }
  func.func @transform_1(%arg0: i32) -> (i32, i32) {
    %c0_i32 = arith.constant 0 : i32
    %c0_i32_0 = arith.constant 0 : i32
    %c0_i32_1 = arith.constant 0 : i32
    return %c0_i32, %c0_i32_0 : i32, i32
  }
  func.func @transform_2(%arg0: i32) -> (i32, i32) {
    %c0_i32 = arith.constant 0 : i32
    %c0_i32_0 = arith.constant 0 : i32
    %c0_i32_1 = arith.constant 0 : i32
    return %c0_i32, %c0_i32_0 : i32, i32
  }
  func.func @transform_3(%arg0: i32) -> (i32, i32) {
    %c0_i32 = arith.constant 0 : i32
    %c0_i32_0 = arith.constant 0 : i32
    %c0_i32_1 = arith.constant 0 : i32
    return %c0_i32, %c0_i32_0 : i32, i32
  }
  func.func @transform_4(%arg0: i32) -> (i32, i32) {
    %c0_i32 = arith.constant 0 : i32
    %c0_i32_0 = arith.constant 0 : i32
    return %arg0, %c0_i32 : i32, i32
  }
}

</mosaic_0001>

<llo_original>
// kernel: tpu_custom_call.1
$region0: #{tpu_custom_call.1}
  #allocation0 [shape = 'u32[]', space=smem, size = 0x4, offset = 0x4, fixed_abs, tag = 'smem constant byte address 0x4 - core index']
  #allocation1 [shape = 'u32[144,128]{1,0:T(1,128)}', space=vmem, size = 0x12000, scoped, tag = 'internal scratch']
  %s0 = inlined_call_operand.vmem [shape: bf16[2048,147], index: 0, kind: input, shape index: {}]
  %s1 = inlined_call_operand.vmem [shape: bf16[147,16], index: 1, kind: input, shape index: {}]
  %s2 = inlined_call_operand.vmem [shape: f32[1,16], index: 2, kind: input, shape index: {}]
  %s3 = inlined_call_operand.vmem [shape: f32[1,16], index: 3, kind: input, shape index: {}]
  %s4 = inlined_call_operand.vmem [shape: bf16[2048,16], index: 4, kind: output, shape index: {}]
  %s5 = sld [smem:[#allocation0]]
  $region49: #{tpu_custom_call.1} parent=0
    _
  %s7 = ssub.s32 1, %s5
  %s8 = scalar_select 0, %s7, %s5
  loop: start=0, step=1, limit=4
  $region2: #{tpu_custom_call.1} parent=0 // loop_pre_header
    _
  $region3: #{tpu_custom_call.1} parent=0 // loop_header
    %s10 = sphi 0, %s14
    %p11 = scmp.ge.s32.totalorder %s10, 4
    %s20 = sphi 0, %s22
    %s23 = sphi 0, %s20
    %s24 = sphi 0, %s23
    %s40 = sphi 0, %s24
    %s44 = sphi 0, %s44
    %s46 = sphi 0, %s44
    %s47 = sphi 0, %s46
    %s61 = sphi 0, %s47
    %s65 = sphi 0, %s65
    %s67 = sphi 0, %s65
    %s68 = sphi 0, %s67
    %s82 = sphi 0, %s68
    %s86 = sphi 0, %s86
    %s88 = sphi 0, %s86
    %s89 = sphi 0, %s88
    %s103 = sphi 0, %s89
    %s109 = sphi 0, %s111
    %s112 = sphi 0, %s109
    %s113 = sphi 0, %s112
    %s129 = sphi 0, %s113
  $region4: #{tpu_custom_call.1} parent=0 // loop_header_branch
    %13 = sbr.rel (%p11) target = $region8
  $region5: #{tpu_custom_call.1} parent=0 // loop_body
    %s15 = ssub.s32 %s10, 1
    %s16 = ssub.s32 %s10, 2
    %s17 = sadd.s32 %s10, 1
    %s18 = ssub.s32 %s10, %s17
    %p19 = scmp.eq.s32.totalorder %s18, 0
    %s21 = sadd.s32 %s20, 1
    %s22 = scalar_select %p19, %s20, %s21
    %p25 = pneg %p19
    %p26 = scmp.eq.s32.totalorder %s10, 1
    %p27 = por %p25, %p26
    %p28 = scmp.ne.s32.totalorder %s20, %s23
    %p29 = scmp.eq.s32.totalorder %s10, 0
    %p30 = por %p28, %p29
    %p31 = scmp.ne.s32.totalorder %s20, %s23
    %p32 = scmp.eq.s32.totalorder %s15, 1
    %p33 = por %p31, %p32
    %p34 = scmp.ne.s32.totalorder %s23, %s24
    %p35 = scmp.eq.s32.totalorder %s15, 0
    %p36 = por %p34, %p35
    %p37 = scmp.ne.s32.totalorder %s23, %s24
    %p38 = scmp.eq.s32.totalorder %s16, 1
    %p39 = por %p37, %p38
    %p41 = scmp.ne.s32.totalorder %s24, %s40
    %p42 = scmp.eq.s32.totalorder %s16, 0
    %p43 = por %p41, %p42
    %s45 = sadd.s32 %s44, 1
    %p48 = scmp.eq.s32.totalorder %s10, 1
    %p49 = scmp.ne.s32.totalorder %s44, %s46
    %p50 = scmp.eq.s32.totalorder %s10, 0
    %p51 = por %p49, %p50
    %p52 = scmp.ne.s32.totalorder %s44, %s46
    %p53 = scmp.eq.s32.totalorder %s15, 1
    %p54 = por %p52, %p53
    %p55 = scmp.ne.s32.totalorder %s46, %s47
    %p56 = scmp.eq.s32.totalorder %s15, 0
    %p57 = por %p55, %p56
    %p58 = scmp.ne.s32.totalorder %s46, %s47
    %p59 = scmp.eq.s32.totalorder %s16, 1
    %p60 = por %p58, %p59
    %p62 = scmp.ne.s32.totalorder %s47, %s61
    %p63 = scmp.eq.s32.totalorder %s16, 0
    %p64 = por %p62, %p63
    %s66 = sadd.s32 %s65, 1
    %p69 = scmp.eq.s32.totalorder %s10, 1
    %p70 = scmp.ne.s32.totalorder %s65, %s67
    %p71 = scmp.eq.s32.totalorder %s10, 0
    %p72 = por %p70, %p71
    %p73 = scmp.ne.s32.totalorder %s65, %s67
    %p74 = scmp.eq.s32.totalorder %s15, 1
    %p75 = por %p73, %p74
    %p76 = scmp.ne.s32.totalorder %s67, %s68
    %p77 = scmp.eq.s32.totalorder %s15, 0
    %p78 = por %p76, %p77
    %p79 = scmp.ne.s32.totalorder %s67, %s68
    %p80 = scmp.eq.s32.totalorder %s16, 1
    %p81 = por %p79, %p80
    %p83 = scmp.ne.s32.totalorder %s68, %s82
    %p84 = scmp.eq.s32.totalorder %s16, 0
    %p85 = por %p83, %p84
    %s87 = sadd.s32 %s86, 1
    %p90 = scmp.eq.s32.totalorder %s10, 1
    %p91 = scmp.ne.s32.totalorder %s86, %s88
    %p92 = scmp.eq.s32.totalorder %s10, 0
    %p93 = por %p91, %p92
    %p94 = scmp.ne.s32.totalorder %s86, %s88
    %p95 = scmp.eq.s32.totalorder %s15, 1
    %p96 = por %p94, %p95
    %p97 = scmp.ne.s32.totalorder %s88, %s89
    %p98 = scmp.eq.s32.totalorder %s15, 0
    %p99 = por %p97, %p98
    %p100 = scmp.ne.s32.totalorder %s88, %s89
    %p101 = scmp.eq.s32.totalorder %s16, 1
    %p102 = por %p100, %p101
    %p104 = scmp.ne.s32.totalorder %s89, %s103
    %p105 = scmp.eq.s32.totalorder %s16, 0
    %p106 = por %p104, %p105
    %s107 = ssub.s32 %s10, %s17
    %p108 = scmp.eq.s32.totalorder %s107, 0
    %s110 = sadd.s32 %s109, 1
    %s111 = scalar_select %p108, %s109, %s110
    %p114 = pneg %p108
    %p115 = scmp.eq.s32.totalorder %s10, 1
    %p116 = por %p114, %p115
    %p117 = scmp.ne.s32.totalorder %s109, %s112
    %p118 = scmp.eq.s32.totalorder %s10, 0
    %p119 = por %p117, %p118
    %p120 = scmp.ne.s32.totalorder %s109, %s112
    %p121 = scmp.eq.s32.totalorder %s15, 1
    %p122 = por %p120, %p121
    %p123 = scmp.ne.s32.totalorder %s112, %s113
    %p124 = scmp.eq.s32.totalorder %s15, 0
    %p125 = por %p123, %p124
    %p126 = scmp.ne.s32.totalorder %s112, %s113
    %p127 = scmp.eq.s32.totalorder %s16, 1
    %p128 = por %p126, %p127
    %p130 = scmp.ne.s32.totalorder %s113, %s129
    %p131 = scmp.eq.s32.totalorder %s16, 0
    %p132 = por %p130, %p131
    %p133 = scmp.le.s32.totalorder 1, %s10
    %p134 = scmp.lt.s32.totalorder %s10, 3
    %p135 = pnand %p133, %p134
    %p136 = pneg %p135
    // Predicated region
    $region9: #{tpu_custom_call.1} parent=5 // pred_check
      _
    $region10: #{tpu_custom_call.1} parent=5 // pred_check_branch
      %138 = sbr.rel (%p135) target = $region12
    $region11: #{tpu_custom_call.1} parent=5 // pred_region
      %s139 = ssub.s32 %s10, 1
      // Predicated region
      $region13: #{tpu_custom_call.1} parent=11 // pred_check
        %p140 = pneg %p57
      $region14: #{tpu_custom_call.1} parent=11 // pred_check_branch
        %142 = sbr.rel (%p140) target = $region16
      $region15: #{tpu_custom_call.1} parent=11 // pred_region
        _
      $region16: #{tpu_custom_call.1} parent=11 // pred_fallthru
        _
      // Predicated region
      $region17: #{tpu_custom_call.1} parent=11 // pred_check
        %p143 = pneg %p78
      $region18: #{tpu_custom_call.1} parent=11 // pred_check_branch
        %145 = sbr.rel (%p143) target = $region20
      $region19: #{tpu_custom_call.1} parent=11 // pred_region
        _
      $region20: #{tpu_custom_call.1} parent=11 // pred_fallthru
        _
      // Predicated region
      $region21: #{tpu_custom_call.1} parent=11 // pred_check
        %p146 = pneg %p99
      $region22: #{tpu_custom_call.1} parent=11 // pred_check_branch
        %148 = sbr.rel (%p146) target = $region24
      $region23: #{tpu_custom_call.1} parent=11 // pred_region
        _
      $region24: #{tpu_custom_call.1} parent=11 // pred_fallthru
        _
    $region12: #{tpu_custom_call.1} parent=5 // pred_fallthru
      _
    %p149 = scmp.lt.s32.totalorder %s10, 2
    // Predicated region
    $region25: #{tpu_custom_call.1} parent=5 // pred_check
      %p150 = pneg %p149
    $region26: #{tpu_custom_call.1} parent=5 // pred_check_branch
      %152 = sbr.rel (%p150) target = $region28
    $region27: #{tpu_custom_call.1} parent=5 // pred_region
      // Predicated region
      $region29: #{tpu_custom_call.1} parent=27 // pred_check
        %p153 = pneg %p30
      $region30: #{tpu_custom_call.1} parent=27 // pred_check_branch
        %155 = sbr.rel (%p153) target = $region32
      $region31: #{tpu_custom_call.1} parent=27 // pred_region
        %s156 = smul.u32 128, %s10
        %p157 = scmp.lt.s32.totalorder %s156, 255
        %s158 = scalar_select %p157, %s156, 255
        %s159 = smul.addr %s158, 2
        %s160 = smul.addr %s159, 4
        %s161 = scalar_lea.vmem %s0, %s160
        %s162 = smul.u32 128, %s10
      $region32: #{tpu_custom_call.1} parent=27 // pred_fallthru
        _
    $region28: #{tpu_custom_call.1} parent=5 // pred_fallthru
      _
    %p163 = scmp.le.s32.totalorder 1, %s10
    %p164 = scmp.lt.s32.totalorder %s10, 3
    %p165 = pnand %p163, %p164
    %p166 = pneg %p165
    // Predicated region
    $region33: #{tpu_custom_call.1} parent=5 // pred_check
      _
    $region34: #{tpu_custom_call.1} parent=5 // pred_check_branch
      %168 = sbr.rel (%p165) target = $region36
    $region35: #{tpu_custom_call.1} parent=5 // pred_region
      %s169 = ssub.s32 %s10, 1
      %s170 = smul.u32 128, %s15
      %p171 = scmp.lt.s32.totalorder %s170, 255
      %s172 = scalar_select %p171, %s170, 255
      %s173 = smul.addr %s172, 2
      %s174 = smul.addr %s173, 4
      %s175 = scalar_lea.vmem %s0, %s174
      %p176 = pneg %p36
      %p177 = pneg %p33
      %p178 = pneg %p57
      %p179 = pneg %p54
      %p180 = pneg %p78
      %p181 = pneg %p75
      %p182 = pneg %p99
      %p183 = pneg %p96
      %p184 = pneg %p125
      %p185 = pneg %p122
      %s186 = smul.u32 128, %s15
      %p187 = scmp.lt.s32.totalorder %s186, 255
      %s188 = scalar_select %p187, %s186, 255
      %s189 = smul.addr %s188, 4
      %s190 = scalar_lea.vmem %s4, %s189
      %s191 = smul.u32 128, %s15
      %p192 = scmp.lt.s32.totalorder %s191, 255
      %s193 = scalar_select %p192, %s191, 255
      %s194 = smul.addr %s193, 2
      %s195 = smul.addr %s194, 4
      %s196 = scalar_lea.vmem %s0, %s195
      %s197 = smul.u32 128, %s15
      %s198 = smul.u32 128, %s15
      %p199 = scmp.lt.s32.totalorder %s198, 255
      %s200 = scalar_select %p199, %s198, 255
      %s201 = smul.addr %s200, 4
      %s202 = scalar_lea.vmem %s4, %s201
      %s203 = smul.u32 128, %s15
      %v205 = vld [vmem:[%s196] sm:$0xff]
      %v206 = vld [vmem:[%s196 + $0x8] sm:$0xff]
      %v207 = vld [vmem:[%s196 + $0x10] sm:$0xff]
      %v208 = vld [vmem:[%s196 + $0x18] sm:$0xff]
      %v209 = vld [vmem:[%s196 + $0x20] sm:$0xff]
      %v210 = vld [vmem:[%s196 + $0x28] sm:$0xff]
      %v211 = vld [vmem:[%s196 + $0x30] sm:$0xff]
      %v212 = vld [vmem:[%s196 + $0x38] sm:$0xff]
      %v213 = vld [vmem:[%s196 + $0x40] sm:$0xff]
      %v214 = vld [vmem:[%s196 + $0x48] sm:$0xff]
      %v215 = vld [vmem:[%s196 + $0x50] sm:$0xff]
      %v216 = vld [vmem:[%s196 + $0x58] sm:$0xff]
      %v217 = vld [vmem:[%s196 + $0x60] sm:$0xff]
      %v218 = vld [vmem:[%s196 + $0x68] sm:$0xff]
      %v219 = vld [vmem:[%s196 + $0x70] sm:$0xff]
      %v220 = vld [vmem:[%s196 + $0x78] sm:$0xff]
      %v221 = vld [vmem:[%s196 + $0x80] sm:$0xff]
      %v222 = vld [vmem:[%s196 + $0x88] sm:$0xff]
      %v223 = vld [vmem:[%s196 + $0x90] sm:$0xff]
      %v224 = vld [vmem:[%s196 + $0x98] sm:$0xff]
      %v225 = vld [vmem:[%s196 + $0xa0] sm:$0xff]
      %v226 = vld [vmem:[%s196 + $0xa8] sm:$0xff]
      %v227 = vld [vmem:[%s196 + $0xb0] sm:$0xff]
      %v228 = vld [vmem:[%s196 + $0xb8] sm:$0xff]
      %v229 = vld [vmem:[%s196 + $0xc0] sm:$0xff]
      %v230 = vld [vmem:[%s196 + $0xc8] sm:$0xff]
      %v231 = vld [vmem:[%s196 + $0xd0] sm:$0xff]
      %v232 = vld [vmem:[%s196 + $0xd8] sm:$0xff]
      %v233 = vld [vmem:[%s196 + $0xe0] sm:$0xff]
      %v234 = vld [vmem:[%s196 + $0xe8] sm:$0xff]
      %v235 = vld [vmem:[%s196 + $0xf0] sm:$0xff]
      %v236 = vld [vmem:[%s196 + $0xf8] sm:$0xff]
      %v237 = vld [vmem:[%s196 + $0x100] sm:$0xff]
      %v238 = vld [vmem:[%s196 + $0x108] sm:$0xff]
      %v239 = vld [vmem:[%s196 + $0x110] sm:$0xff]
      %v240 = vld [vmem:[%s196 + $0x118] sm:$0xff]
      %v241 = vld [vmem:[%s196 + $0x120] sm:$0xff]
      %v242 = vld [vmem:[%s196 + $0x128] sm:$0xff]
      %v243 = vld [vmem:[%s196 + $0x130] sm:$0xff]
      %v244 = vld [vmem:[%s196 + $0x138] sm:$0xff]
      %v245 = vld [vmem:[%s196 + $0x140] sm:$0xff]
      %v246 = vld [vmem:[%s196 + $0x148] sm:$0xff]
      %v247 = vld [vmem:[%s196 + $0x150] sm:$0xff]
      %v248 = vld [vmem:[%s196 + $0x158] sm:$0xff]
      %v249 = vld [vmem:[%s196 + $0x160] sm:$0xff]
      %v250 = vld [vmem:[%s196 + $0x168] sm:$0xff]
      %v251 = vld [vmem:[%s196 + $0x170] sm:$0xff]
      %v252 = vld [vmem:[%s196 + $0x178] sm:$0xff]
      %v253 = vld [vmem:[%s196 + $0x180] sm:$0xff]
      %v254 = vld [vmem:[%s196 + $0x188] sm:$0xff]
      %v255 = vld [vmem:[%s196 + $0x190] sm:$0xff]
      %v256 = vld [vmem:[%s196 + $0x198] sm:$0xff]
      %v257 = vld [vmem:[%s196 + $0x1a0] sm:$0xff]
      %v258 = vld [vmem:[%s196 + $0x1a8] sm:$0xff]
      %v259 = vld [vmem:[%s196 + $0x1b0] sm:$0xff]
      %v260 = vld [vmem:[%s196 + $0x1b8] sm:$0xff]
      %v261 = vld [vmem:[%s196 + $0x1c0] sm:$0xff]
      %v262 = vld [vmem:[%s196 + $0x1c8] sm:$0xff]
      %v263 = vld [vmem:[%s196 + $0x1d0] sm:$0xff]
      %v264 = vld [vmem:[%s196 + $0x1d8] sm:$0xff]
      %v265 = vld [vmem:[%s196 + $0x1e0] sm:$0xff]
      %v266 = vld [vmem:[%s196 + $0x1e8] sm:$0xff]
      %v267 = vld [vmem:[%s196 + $0x1f0] sm:$0xff]
      %v268 = vld [vmem:[%s196 + $0x1f8] sm:$0xff]
      %v269 = vld [vmem:[%s196 + $0x200] sm:$0xff]
      %v270 = vld [vmem:[%s196 + $0x208] sm:$0xff]
      %v271 = vld [vmem:[%s196 + $0x210] sm:$0xff]
      %v272 = vld [vmem:[%s196 + $0x218] sm:$0xff]
      %v273 = vld [vmem:[%s196 + $0x220] sm:$0xff]
      %v274 = vld [vmem:[%s196 + $0x228] sm:$0xff]
      %v275 = vld [vmem:[%s196 + $0x230] sm:$0xff]
      %v276 = vld [vmem:[%s196 + $0x238] sm:$0xff]
      %v277 = vld [vmem:[%s196 + $0x240] sm:$0xff]
      %v278 = vld [vmem:[%s196 + $0x248] sm:$0xff]
      %v279 = vld [vmem:[%s196 + $0x250] sm:$0xff]
      %v280 = vld [vmem:[%s196 + $0x258] sm:$0xff]
      %v281 = vld [vmem:[%s196 + $0x260] sm:$0xff]
      %v282 = vld [vmem:[%s196 + $0x268] sm:$0xff]
      %v283 = vld [vmem:[%s196 + $0x270] sm:$0xff]
      %v284 = vld [vmem:[%s196 + $0x278] sm:$0xff]
      %v285 = vld [vmem:[%s196 + $0x280] sm:$0xff]
      %v286 = vld [vmem:[%s196 + $0x288] sm:$0xff]
      %v287 = vld [vmem:[%s196 + $0x290] sm:$0xff]
      %v288 = vld [vmem:[%s196 + $0x298] sm:$0xff]
      %v289 = vld [vmem:[%s196 + $0x2a0] sm:$0xff]
      %v290 = vld [vmem:[%s196 + $0x2a8] sm:$0xff]
      %v291 = vld [vmem:[%s196 + $0x2b0] sm:$0xff]
      %v292 = vld [vmem:[%s196 + $0x2b8] sm:$0xff]
      %v293 = vld [vmem:[%s196 + $0x2c0] sm:$0xff]
      %v294 = vld [vmem:[%s196 + $0x2c8] sm:$0xff]
      %v295 = vld [vmem:[%s196 + $0x2d0] sm:$0xff]
      %v296 = vld [vmem:[%s196 + $0x2d8] sm:$0xff]
      %v297 = vld [vmem:[%s196 + $0x2e0] sm:$0xff]
      %v298 = vld [vmem:[%s196 + $0x2e8] sm:$0xff]
      %v299 = vld [vmem:[%s196 + $0x2f0] sm:$0xff]
      %v300 = vld [vmem:[%s196 + $0x2f8] sm:$0xff]
      %v301 = vld [vmem:[%s196 + $0x300] sm:$0xff]
      %v302 = vld [vmem:[%s196 + $0x308] sm:$0xff]
      %v303 = vld [vmem:[%s196 + $0x310] sm:$0xff]
      %v304 = vld [vmem:[%s196 + $0x318] sm:$0xff]
      %v305 = vld [vmem:[%s196 + $0x320] sm:$0xff]
      %v306 = vld [vmem:[%s196 + $0x328] sm:$0xff]
      %v307 = vld [vmem:[%s196 + $0x330] sm:$0xff]
      %v308 = vld [vmem:[%s196 + $0x338] sm:$0xff]
      %v309 = vld [vmem:[%s196 + $0x340] sm:$0xff]
      %v310 = vld [vmem:[%s196 + $0x348] sm:$0xff]
      %v311 = vld [vmem:[%s196 + $0x350] sm:$0xff]
      %v312 = vld [vmem:[%s196 + $0x358] sm:$0xff]
      %v313 = vld [vmem:[%s196 + $0x360] sm:$0xff]
      %v314 = vld [vmem:[%s196 + $0x368] sm:$0xff]
      %v315 = vld [vmem:[%s196 + $0x370] sm:$0xff]
      %v316 = vld [vmem:[%s196 + $0x378] sm:$0xff]
      %v317 = vld [vmem:[%s196 + $0x380] sm:$0xff]
      %v318 = vld [vmem:[%s196 + $0x388] sm:$0xff]
      %v319 = vld [vmem:[%s196 + $0x390] sm:$0xff]
      %v320 = vld [vmem:[%s196 + $0x398] sm:$0xff]
      %v321 = vld [vmem:[%s196 + $0x3a0] sm:$0xff]
      %v322 = vld [vmem:[%s196 + $0x3a8] sm:$0xff]
      %v323 = vld [vmem:[%s196 + $0x3b0] sm:$0xff]
      %v324 = vld [vmem:[%s196 + $0x3b8] sm:$0xff]
      %v325 = vld [vmem:[%s196 + $0x3c0] sm:$0xff]
      %v326 = vld [vmem:[%s196 + $0x3c8] sm:$0xff]
      %v327 = vld [vmem:[%s196 + $0x3d0] sm:$0xff]
      %v328 = vld [vmem:[%s196 + $0x3d8] sm:$0xff]
      %v329 = vld [vmem:[%s196 + $0x3e0] sm:$0xff]
      %v330 = vld [vmem:[%s196 + $0x3e8] sm:$0xff]
      %v331 = vld [vmem:[%s196 + $0x3f0] sm:$0xff]
      %v332 = vld [vmem:[%s196 + $0x3f8] sm:$0xff]
      %v333 = vld [vmem:[%s1] sm:$0xf]
      %v334 = vld [vmem:[%s1 + $0x4] sm:$0xf]
      %v335 = vld [vmem:[%s1 + $0x8] sm:$0xf]
      %v336 = vld [vmem:[%s1 + $0xc] sm:$0xf]
      %v337 = vld [vmem:[%s1 + $0x10] sm:$0xf]
      %v338 = vld [vmem:[%s1 + $0x14] sm:$0xf]
      %v339 = vld [vmem:[%s1 + $0x18] sm:$0xf]
      %v340 = vld [vmem:[%s1 + $0x1c] sm:$0xf]
      %v341 = vld [vmem:[%s1 + $0x20] sm:$0xf]
      %v342 = vld [vmem:[%s1 + $0x24] sm:$0xf]
      %v343 = vld [vmem:[%s1 + $0x28] sm:$0xf]
      %v344 = vld [vmem:[%s1 + $0x2c] sm:$0xf]
      %v345 = vld [vmem:[%s1 + $0x30] sm:$0xf]
      %v346 = vld [vmem:[%s1 + $0x34] sm:$0xf]
      %v347 = vld [vmem:[%s1 + $0x38] sm:$0xf]
      %v348 = vld [vmem:[%s1 + $0x3c] sm:$0xf]
      %v349 = vld [vmem:[%s1 + $0x40] sm:$0xf]
      %v350 = vld [vmem:[%s1 + $0x44] sm:$0xf]
      %v351 = vld [vmem:[%s1 + $0x48] sm:$0x3]
      %v480 = vunpack.c.l.b16 %v205
      %v481 = vunpack.c.h.b16 %v205
      %v482 = vunpack.c.l.b16 %v206
      %v483 = vunpack.c.h.b16 %v206
      %v484 = vunpack.c.l.b16 %v207
      %v485 = vunpack.c.h.b16 %v207
      %v486 = vunpack.c.l.b16 %v208
      %v487 = vunpack.c.h.b16 %v208
      %v488 = vunpack.c.l.b16 %v209
      %v489 = vunpack.c.h.b16 %v209
      %v490 = vunpack.c.l.b16 %v210
      %v491 = vunpack.c.h.b16 %v210
      %v492 = vunpack.c.l.b16 %v211
      %v493 = vunpack.c.h.b16 %v211
      %v494 = vunpack.c.l.b16 %v212
      %v495 = vunpack.c.h.b16 %v212
      %v496 = vunpack.c.l.b16 %v213
      %v497 = vunpack.c.h.b16 %v213
      %v498 = vunpack.c.l.b16 %v214
      %v499 = vunpack.c.h.b16 %v214
      %v500 = vunpack.c.l.b16 %v215
      %v501 = vunpack.c.h.b16 %v215
      %v502 = vunpack.c.l.b16 %v216
      %v503 = vunpack.c.h.b16 %v216
      %v504 = vunpack.c.l.b16 %v217
      %v505 = vunpack.c.h.b16 %v217
      %v506 = vunpack.c.l.b16 %v218
      %v507 = vunpack.c.h.b16 %v218
      %v508 = vunpack.c.l.b16 %v219
      %v509 = vunpack.c.h.b16 %v219
      %v510 = vunpack.c.l.b16 %v220
      %v511 = vunpack.c.h.b16 %v220
      %v512 = vunpack.c.l.b16 %v221
      %v513 = vunpack.c.h.b16 %v221
      %v514 = vunpack.c.l.b16 %v222
      %v515 = vunpack.c.h.b16 %v222
      %v516 = vunpack.c.l.b16 %v223
      %v517 = vunpack.c.h.b16 %v223
      %v518 = vunpack.c.l.b16 %v224
      %v519 = vunpack.c.h.b16 %v224
      %v520 = vunpack.c.l.b16 %v225
      %v521 = vunpack.c.h.b16 %v225
      %v522 = vunpack.c.l.b16 %v226
      %v523 = vunpack.c.h.b16 %v226
      %v524 = vunpack.c.l.b16 %v227
      %v525 = vunpack.c.h.b16 %v227
      %v526 = vunpack.c.l.b16 %v228
      %v527 = vunpack.c.h.b16 %v228
      %v528 = vunpack.c.l.b16 %v229
      %v529 = vunpack.c.h.b16 %v229
      %v530 = vunpack.c.l.b16 %v230
      %v531 = vunpack.c.h.b16 %v230
      %v532 = vunpack.c.l.b16 %v231
      %v533 = vunpack.c.h.b16 %v231
      %v534 = vunpack.c.l.b16 %v232
      %v535 = vunpack.c.h.b16 %v232
      %v536 = vunpack.c.l.b16 %v233
      %v537 = vunpack.c.h.b16 %v233
      %v538 = vunpack.c.l.b16 %v234
      %v539 = vunpack.c.h.b16 %v234
      %v540 = vunpack.c.l.b16 %v235
      %v541 = vunpack.c.h.b16 %v235
      %v542 = vunpack.c.l.b16 %v236
      %v543 = vunpack.c.h.b16 %v236
      %v544 = vunpack.c.l.b16 %v237
      %v545 = vunpack.c.h.b16 %v237
      %v546 = vunpack.c.l.b16 %v238
      %v547 = vunpack.c.h.b16 %v238
      %v548 = vunpack.c.l.b16 %v239
      %v549 = vunpack.c.h.b16 %v239
      %v550 = vunpack.c.l.b16 %v240
      %v551 = vunpack.c.h.b16 %v240
      %v552 = vunpack.c.l.b16 %v241
      %v553 = vunpack.c.h.b16 %v241
      %v554 = vunpack.c.l.b16 %v242
      %v555 = vunpack.c.h.b16 %v242
      %v556 = vunpack.c.l.b16 %v243
      %v557 = vunpack.c.h.b16 %v243
      %v558 = vunpack.c.l.b16 %v244
      %v559 = vunpack.c.h.b16 %v244
      %v560 = vunpack.c.l.b16 %v245
      %v561 = vunpack.c.h.b16 %v245
      %v562 = vunpack.c.l.b16 %v246
      %v563 = vunpack.c.h.b16 %v246
      %v564 = vunpack.c.l.b16 %v247
      %v565 = vunpack.c.h.b16 %v247
      %v566 = vunpack.c.l.b16 %v248
      %v567 = vunpack.c.h.b16 %v248
      %v568 = vunpack.c.l.b16 %v249
      %v569 = vunpack.c.h.b16 %v249
      %v570 = vunpack.c.l.b16 %v250
      %v571 = vunpack.c.h.b16 %v250
      %v572 = vunpack.c.l.b16 %v251
      %v573 = vunpack.c.h.b16 %v251
      %v574 = vunpack.c.l.b16 %v252
      %v575 = vunpack.c.h.b16 %v252
      %v576 = vunpack.c.l.b16 %v253
      %v577 = vunpack.c.h.b16 %v253
      %v578 = vunpack.c.l.b16 %v254
      %v579 = vunpack.c.h.b16 %v254
      %v580 = vunpack.c.l.b16 %v255
      %v581 = vunpack.c.h.b16 %v255
      %v582 = vunpack.c.l.b16 %v256
      %v583 = vunpack.c.h.b16 %v256
      %v584 = vunpack.c.l.b16 %v257
      %v585 = vunpack.c.h.b16 %v257
      %v586 = vunpack.c.l.b16 %v258
      %v587 = vunpack.c.h.b16 %v258
      %v588 = vunpack.c.l.b16 %v259
      %v589 = vunpack.c.h.b16 %v259
      %v590 = vunpack.c.l.b16 %v260
      %v591 = vunpack.c.h.b16 %v260
      %v592 = vunpack.c.l.b16 %v261
      %v593 = vunpack.c.h.b16 %v261
      %v594 = vunpack.c.l.b16 %v262
      %v595 = vunpack.c.h.b16 %v262
      %v596 = vunpack.c.l.b16 %v263
      %v597 = vunpack.c.h.b16 %v263
      %v598 = vunpack.c.l.b16 %v264
      %v599 = vunpack.c.h.b16 %v264
      %v600 = vunpack.c.l.b16 %v265
      %v601 = vunpack.c.h.b16 %v265
      %v602 = vunpack.c.l.b16 %v266
      %v603 = vunpack.c.h.b16 %v266
      %v604 = vunpack.c.l.b16 %v267
      %v605 = vunpack.c.h.b16 %v267
      %v606 = vunpack.c.l.b16 %v268
      %v607 = vunpack.c.h.b16 %v268
      %v608 = vunpack.c.l.b16 %v269
      %v609 = vunpack.c.h.b16 %v269
      %v610 = vunpack.c.l.b16 %v270
      %v611 = vunpack.c.h.b16 %v270
      %v612 = vunpack.c.l.b16 %v271
      %v613 = vunpack.c.h.b16 %v271
      %v614 = vunpack.c.l.b16 %v272
      %v615 = vunpack.c.h.b16 %v272
      %v616 = vunpack.c.l.b16 %v273
      %v617 = vunpack.c.h.b16 %v273
      %v618 = vunpack.c.l.b16 %v274
      %v619 = vunpack.c.h.b16 %v274
      %v620 = vunpack.c.l.b16 %v275
      %v621 = vunpack.c.h.b16 %v275
      %v622 = vunpack.c.l.b16 %v276
      %v623 = vunpack.c.h.b16 %v276
      %v624 = vunpack.c.l.b16 %v277
      %v625 = vunpack.c.h.b16 %v277
      %v626 = vunpack.c.l.b16 %v278
      %v627 = vunpack.c.h.b16 %v278
      %v628 = vunpack.c.l.b16 %v279
      %v629 = vunpack.c.h.b16 %v279
      %v630 = vunpack.c.l.b16 %v280
      %v631 = vunpack.c.h.b16 %v280
      %v632 = vunpack.c.l.b16 %v281
      %v633 = vunpack.c.h.b16 %v281
      %v634 = vunpack.c.l.b16 %v282
      %v635 = vunpack.c.h.b16 %v282
      %v636 = vunpack.c.l.b16 %v283
      %v637 = vunpack.c.h.b16 %v283
      %v638 = vunpack.c.l.b16 %v284
      %v639 = vunpack.c.h.b16 %v284
      %v640 = vunpack.c.l.b16 %v285
      %v641 = vunpack.c.h.b16 %v285
      %v642 = vunpack.c.l.b16 %v286
      %v643 = vunpack.c.h.b16 %v286
      %v644 = vunpack.c.l.b16 %v287
      %v645 = vunpack.c.h.b16 %v287
      %v646 = vunpack.c.l.b16 %v288
      %v647 = vunpack.c.h.b16 %v288
      %v648 = vunpack.c.l.b16 %v289
      %v649 = vunpack.c.h.b16 %v289
      %v650 = vunpack.c.l.b16 %v290
      %v651 = vunpack.c.h.b16 %v290
      %v652 = vunpack.c.l.b16 %v291
      %v653 = vunpack.c.h.b16 %v291
      %v654 = vunpack.c.l.b16 %v292
      %v655 = vunpack.c.h.b16 %v292
      %v656 = vunpack.c.l.b16 %v293
      %v657 = vunpack.c.h.b16 %v293
      %v658 = vunpack.c.l.b16 %v294
      %v659 = vunpack.c.h.b16 %v294
      %v660 = vunpack.c.l.b16 %v295
      %v661 = vunpack.c.h.b16 %v295
      %v662 = vunpack.c.l.b16 %v296
      %v663 = vunpack.c.h.b16 %v296
      %v664 = vunpack.c.l.b16 %v297
      %v665 = vunpack.c.h.b16 %v297
      %v666 = vunpack.c.l.b16 %v298
      %v667 = vunpack.c.h.b16 %v298
      %v668 = vunpack.c.l.b16 %v299
      %v669 = vunpack.c.h.b16 %v299
      %v670 = vunpack.c.l.b16 %v300
      %v671 = vunpack.c.h.b16 %v300
      %v672 = vunpack.c.l.b16 %v301
      %v673 = vunpack.c.h.b16 %v301
      %v674 = vunpack.c.l.b16 %v302
      %v675 = vunpack.c.h.b16 %v302
      %v676 = vunpack.c.l.b16 %v303
      %v677 = vunpack.c.h.b16 %v303
      %v678 = vunpack.c.l.b16 %v304
      %v679 = vunpack.c.h.b16 %v304
      %v680 = vunpack.c.l.b16 %v305
      %v681 = vunpack.c.h.b16 %v305
      %v682 = vunpack.c.l.b16 %v306
      %v683 = vunpack.c.h.b16 %v306
      %v684 = vunpack.c.l.b16 %v307
      %v685 = vunpack.c.h.b16 %v307
      %v686 = vunpack.c.l.b16 %v308
      %v687 = vunpack.c.h.b16 %v308
      %v688 = vunpack.c.l.b16 %v309
      %v689 = vunpack.c.h.b16 %v309
      %v690 = vunpack.c.l.b16 %v310
      %v691 = vunpack.c.h.b16 %v310
      %v692 = vunpack.c.l.b16 %v311
      %v693 = vunpack.c.h.b16 %v311
      %v694 = vunpack.c.l.b16 %v312
      %v695 = vunpack.c.h.b16 %v312
      %v696 = vunpack.c.l.b16 %v313
      %v697 = vunpack.c.h.b16 %v313
      %v698 = vunpack.c.l.b16 %v314
      %v699 = vunpack.c.h.b16 %v314
      %v700 = vunpack.c.l.b16 %v315
      %v701 = vunpack.c.h.b16 %v315
      %v702 = vunpack.c.l.b16 %v316
      %v703 = vunpack.c.h.b16 %v316
      %v704 = vunpack.c.l.b16 %v317
      %v705 = vunpack.c.h.b16 %v317
      %v706 = vunpack.c.l.b16 %v318
      %v707 = vunpack.c.h.b16 %v318
      %v708 = vunpack.c.l.b16 %v319
      %v709 = vunpack.c.h.b16 %v319
      %v710 = vunpack.c.l.b16 %v320
      %v711 = vunpack.c.h.b16 %v320
      %v712 = vunpack.c.l.b16 %v321
      %v713 = vunpack.c.h.b16 %v321
      %v714 = vunpack.c.l.b16 %v322
      %v715 = vunpack.c.h.b16 %v322
      %v716 = vunpack.c.l.b16 %v323
      %v717 = vunpack.c.h.b16 %v323
      %v718 = vunpack.c.l.b16 %v324
      %v719 = vunpack.c.h.b16 %v324
      %v720 = vunpack.c.l.b16 %v325
      %v721 = vunpack.c.h.b16 %v325
      %v722 = vunpack.c.l.b16 %v326
      %v723 = vunpack.c.h.b16 %v326
      %v724 = vunpack.c.l.b16 %v327
      %v725 = vunpack.c.h.b16 %v327
      %v726 = vunpack.c.l.b16 %v328
      %v727 = vunpack.c.h.b16 %v328
      %v728 = vunpack.c.l.b16 %v329
      %v729 = vunpack.c.h.b16 %v329
      %v730 = vunpack.c.l.b16 %v330
      %v731 = vunpack.c.h.b16 %v330
      %v732 = vunpack.c.l.b16 %v331
      %v733 = vunpack.c.h.b16 %v331
      %v734 = vunpack.c.l.b16 %v332
      %v735 = vunpack.c.h.b16 %v332
      %v736 = vpack.c.b16 %v482, %v480
      %v737 = vpack.c.b16 %v483, %v481
      %v738 = vpack.c.b16 %v486, %v484
      %v739 = vpack.c.b16 %v487, %v485
      %v740 = vpack.c.b16 %v490, %v488
      %v741 = vpack.c.b16 %v491, %v489
      %v742 = vpack.c.b16 %v494, %v492
      %v743 = vpack.c.b16 %v495, %v493
      %v744 = vpack.c.b16 %v498, %v496
      %v745 = vpack.c.b16 %v499, %v497
      %v746 = vpack.c.b16 %v502, %v500
      %v747 = vpack.c.b16 %v503, %v501
      %v748 = vpack.c.b16 %v506, %v504
      %v749 = vpack.c.b16 %v507, %v505
      %v750 = vpack.c.b16 %v510, %v508
      %v751 = vpack.c.b16 %v511, %v509
      %v752 = vpack.c.b16 %v514, %v512
      %v753 = vpack.c.b16 %v515, %v513
      %v754 = vpack.c.b16 %v518, %v516
      %v755 = vpack.c.b16 %v519, %v517
      %v756 = vpack.c.b16 %v522, %v520
      %v757 = vpack.c.b16 %v523, %v521
      %v758 = vpack.c.b16 %v526, %v524
      %v759 = vpack.c.b16 %v527, %v525
      %v760 = vpack.c.b16 %v530, %v528
      %v761 = vpack.c.b16 %v531, %v529
      %v762 = vpack.c.b16 %v534, %v532
      %v763 = vpack.c.b16 %v535, %v533
      %v764 = vpack.c.b16 %v538, %v536
      %v765 = vpack.c.b16 %v539, %v537
      %v766 = vpack.c.b16 %v542, %v540
      %v767 = vpack.c.b16 %v543, %v541
      %v768 = vpack.c.b16 %v546, %v544
      %v769 = vpack.c.b16 %v547, %v545
      %v770 = vpack.c.b16 %v550, %v548
      %v771 = vpack.c.b16 %v551, %v549
      %v772 = vpack.c.b16 %v554, %v552
      %v773 = vpack.c.b16 %v555, %v553
      %v774 = vpack.c.b16 %v558, %v556
      %v775 = vpack.c.b16 %v559, %v557
      %v776 = vpack.c.b16 %v562, %v560
      %v777 = vpack.c.b16 %v563, %v561
      %v778 = vpack.c.b16 %v566, %v564
      %v779 = vpack.c.b16 %v567, %v565
      %v780 = vpack.c.b16 %v570, %v568
      %v781 = vpack.c.b16 %v571, %v569
      %v782 = vpack.c.b16 %v574, %v572
      %v783 = vpack.c.b16 %v575, %v573
      %v784 = vpack.c.b16 %v578, %v576
      %v785 = vpack.c.b16 %v579, %v577
      %v786 = vpack.c.b16 %v582, %v580
      %v787 = vpack.c.b16 %v583, %v581
      %v788 = vpack.c.b16 %v586, %v584
      %v789 = vpack.c.b16 %v587, %v585
      %v790 = vpack.c.b16 %v590, %v588
      %v791 = vpack.c.b16 %v591, %v589
      %v792 = vpack.c.b16 %v594, %v592
      %v793 = vpack.c.b16 %v595, %v593
      %v794 = vpack.c.b16 %v598, %v596
      %v795 = vpack.c.b16 %v599, %v597
      %v796 = vpack.c.b16 %v602, %v600
      %v797 = vpack.c.b16 %v603, %v601
      %v798 = vpack.c.b16 %v606, %v604
      %v799 = vpack.c.b16 %v607, %v605
      %v800 = vpack.c.b16 %v610, %v608
      %v801 = vpack.c.b16 %v611, %v609
      %v802 = vpack.c.b16 %v614, %v612
      %v803 = vpack.c.b16 %v615, %v613
      %v804 = vpack.c.b16 %v618, %v616
      %v805 = vpack.c.b16 %v619, %v617
      %v806 = vpack.c.b16 %v622, %v620
      %v807 = vpack.c.b16 %v623, %v621
      %v808 = vpack.c.b16 %v626, %v624
      %v809 = vpack.c.b16 %v627, %v625
      %v810 = vpack.c.b16 %v630, %v628
      %v811 = vpack.c.b16 %v631, %v629
      %v812 = vpack.c.b16 %v634, %v632
      %v813 = vpack.c.b16 %v635, %v633
      %v814 = vpack.c.b16 %v638, %v636
      %v815 = vpack.c.b16 %v639, %v637
      %v816 = vpack.c.b16 %v642, %v640
      %v817 = vpack.c.b16 %v643, %v641
      %v818 = vpack.c.b16 %v646, %v644
      %v819 = vpack.c.b16 %v647, %v645
      %v820 = vpack.c.b16 %v650, %v648
      %v821 = vpack.c.b16 %v651, %v649
      %v822 = vpack.c.b16 %v654, %v652
      %v823 = vpack.c.b16 %v655, %v653
      %v824 = vpack.c.b16 %v658, %v656
      %v825 = vpack.c.b16 %v659, %v657
      %v826 = vpack.c.b16 %v662, %v660
      %v827 = vpack.c.b16 %v663, %v661
      %v828 = vpack.c.b16 %v666, %v664
      %v829 = vpack.c.b16 %v667, %v665
      %v830 = vpack.c.b16 %v670, %v668
      %v831 = vpack.c.b16 %v671, %v669
      %v832 = vpack.c.b16 %v674, %v672
      %v833 = vpack.c.b16 %v675, %v673
      %v834 = vpack.c.b16 %v678, %v676
      %v835 = vpack.c.b16 %v679, %v677
      %v836 = vpack.c.b16 %v682, %v680
      %v837 = vpack.c.b16 %v683, %v681
      %v838 = vpack.c.b16 %v686, %v684
      %v839 = vpack.c.b16 %v687, %v685
      %v840 = vpack.c.b16 %v690, %v688
      %v841 = vpack.c.b16 %v691, %v689
      %v842 = vpack.c.b16 %v694, %v692
      %v843 = vpack.c.b16 %v695, %v693
      %v844 = vpack.c.b16 %v698, %v696
      %v845 = vpack.c.b16 %v699, %v697
      %v846 = vpack.c.b16 %v702, %v700
      %v847 = vpack.c.b16 %v703, %v701
      %v848 = vpack.c.b16 %v706, %v704
      %v849 = vpack.c.b16 %v707, %v705
      %v850 = vpack.c.b16 %v710, %v708
      %v851 = vpack.c.b16 %v711, %v709
      %v852 = vpack.c.b16 %v714, %v712
      %v853 = vpack.c.b16 %v715, %v713
      %v854 = vpack.c.b16 %v718, %v716
      %v855 = vpack.c.b16 %v719, %v717
      %v856 = vpack.c.b16 %v722, %v720
      %v857 = vpack.c.b16 %v723, %v721
      %v858 = vpack.c.b16 %v726, %v724
      %v859 = vpack.c.b16 %v727, %v725
      %v860 = vpack.c.b16 %v730, %v728
      %v861 = vpack.c.b16 %v731, %v729
      %v862 = vpack.c.b16 %v734, %v732
      %v863 = vpack.c.b16 %v735, %v733
      %v947 = vunpack.c.l.b16 %v333
      %v948 = vunpack.c.l.b16 %v334
      %v949 = vunpack.c.l.b16 %v335
      %v950 = vunpack.c.l.b16 %v336
      %v951 = vunpack.c.l.b16 %v337
      %v952 = vunpack.c.l.b16 %v338
      %v953 = vunpack.c.l.b16 %v339
      %v954 = vunpack.c.l.b16 %v340
      %v955 = vunpack.c.l.b16 %v341
      %v956 = vunpack.c.l.b16 %v342
      %v957 = vunpack.c.l.b16 %v343
      %v958 = vunpack.c.l.b16 %v344
      %v959 = vunpack.c.l.b16 %v345
      %v960 = vunpack.c.l.b16 %v346
      %v961 = vunpack.c.l.b16 %v347
      %v962 = vunpack.c.l.b16 %v348
      %v963 = vunpack.c.l.b16 %v349
      %v964 = vunpack.c.l.b16 %v350
      %v965 = vunpack.c.l.b16 %v351
      %v966 = vpack.c.b16 %v948, %v947
      %v967 = vpack.c.b16 %v950, %v949
      %v968 = vpack.c.b16 %v952, %v951
      %v969 = vpack.c.b16 %v954, %v953
      %v970 = vpack.c.b16 %v956, %v955
      %v971 = vpack.c.b16 %v958, %v957
      %v972 = vpack.c.b16 %v960, %v959
      %v973 = vpack.c.b16 %v962, %v961
      %v974 = vpack.c.b16 %v964, %v963
      %v975 = vpack.c.b16 %v965, %v965
      %vm985 = vcmask 154624
      %v987 = vsel %vm985, %v737, 0
      %v990 = vsel %vm985, %v739, 0
      %v993 = vsel %vm985, %v741, 0
      %v996 = vsel %vm985, %v743, 0
      %v999 = vsel %vm985, %v745, 0
      %v1002 = vsel %vm985, %v747, 0
      %v1005 = vsel %vm985, %v749, 0
      %v1008 = vsel %vm985, %v751, 0
      %v1011 = vsel %vm985, %v753, 0
      %v1014 = vsel %vm985, %v755, 0
      %v1017 = vsel %vm985, %v757, 0
      %v1020 = vsel %vm985, %v759, 0
      %v1023 = vsel %vm985, %v761, 0
      %v1026 = vsel %vm985, %v763, 0
      %v1029 = vsel %vm985, %v765, 0
      %v1032 = vsel %vm985, %v767, 0
      %v1035 = vsel %vm985, %v769, 0
      %v1038 = vsel %vm985, %v771, 0
      %v1041 = vsel %vm985, %v773, 0
      %v1044 = vsel %vm985, %v775, 0
      %v1047 = vsel %vm985, %v777, 0
      %v1050 = vsel %vm985, %v779, 0
      %v1053 = vsel %vm985, %v781, 0
      %v1056 = vsel %vm985, %v783, 0
      %v1059 = vsel %vm985, %v785, 0
      %v1062 = vsel %vm985, %v787, 0
      %v1065 = vsel %vm985, %v789, 0
      %v1068 = vsel %vm985, %v791, 0
      %v1071 = vsel %vm985, %v793, 0
      %v1074 = vsel %vm985, %v795, 0
      %v1077 = vsel %vm985, %v797, 0
      %v1080 = vsel %vm985, %v799, 0
      %v1083 = vsel %vm985, %v801, 0
      %v1086 = vsel %vm985, %v803, 0
      %v1089 = vsel %vm985, %v805, 0
      %v1092 = vsel %vm985, %v807, 0
      %v1095 = vsel %vm985, %v809, 0
      %v1098 = vsel %vm985, %v811, 0
      %v1101 = vsel %vm985, %v813, 0
      %v1104 = vsel %vm985, %v815, 0
      %v1107 = vsel %vm985, %v817, 0
      %v1110 = vsel %vm985, %v819, 0
      %v1113 = vsel %vm985, %v821, 0
      %v1116 = vsel %vm985, %v823, 0
      %v1119 = vsel %vm985, %v825, 0
      %v1122 = vsel %vm985, %v827, 0
      %v1125 = vsel %vm985, %v829, 0
      %v1128 = vsel %vm985, %v831, 0
      %v1131 = vsel %vm985, %v833, 0
      %v1134 = vsel %vm985, %v835, 0
      %v1137 = vsel %vm985, %v837, 0
      %v1140 = vsel %vm985, %v839, 0
      %v1143 = vsel %vm985, %v841, 0
      %v1146 = vsel %vm985, %v843, 0
      %v1149 = vsel %vm985, %v845, 0
      %v1152 = vsel %vm985, %v847, 0
      %v1155 = vsel %vm985, %v849, 0
      %v1158 = vsel %vm985, %v851, 0
      %v1161 = vsel %vm985, %v853, 0
      %v1164 = vsel %vm985, %v855, 0
      %v1167 = vsel %vm985, %v857, 0
      %v1170 = vsel %vm985, %v859, 0
      %v1173 = vsel %vm985, %v861, 0
      %v1176 = vsel %vm985, %v863, 0
      %vm1178 = vcmask 1040384
      %vm1179 = vcmask 1041408
      %v1180 = vsel %vm1178, 4294967295, 65535
      %v1181 = vsel %vm1179, %v1180, 0
      %v1183 = vand.u32 %v975, %v1181
      %1185 = vmatprep.subr.bf16.mxu0 0
      %1186 = vmatpush1.bf16.msra.mxu0 %v966
      %1187 = vmatprep.subr.bf16.mxu0 0
      %1188 = vmatpush1.bf16.msra.mxu0 %v967
      %1189 = vmatprep.subr.bf16.mxu0 0
      %1190 = vmatpush1.bf16.msra.mxu0 %v968
      %1191 = vmatprep.subr.bf16.mxu0 0
      %1192 = vmatpush1.bf16.msra.mxu0 %v969
      %1193 = vmatprep.subr.bf16.mxu0 0
      %1194 = vmatpush1.bf16.msra.mxu0 %v970
      %1195 = vmatprep.subr.bf16.mxu0 0
      %1196 = vmatpush1.bf16.msra.mxu0 %v971
      %1197 = vmatprep.subr.bf16.mxu0 0
      %1198 = vmatpush1.bf16.msra.mxu0 %v972
      %1199 = vmatprep.subr.bf16.mxu0 0
      %1200 = vmatpush1.bf16.msra.mxu0 %v973
      %1201 = vmatprep.subr.bf16.mxu0 0
      %1202 = vmatpush1.bf16.msra.mxu0 %v974
      %1203 = vmatprep.subr.bf16.mxu0 0
      %1204 = vmatpush1.bf16.msra.mxu0 %v1183
      %1205 = vmatprep.subr.bf16.mxu0 0
      %1206 = vmatpush1.bf16.msra.mxu0 0
      %1207 = vmatprep.subr.bf16.mxu0 0
      %1208 = vmatpush1.bf16.msra.mxu0 0
      %1209 = vmatprep.subr.bf16.mxu0 0
      %1210 = vmatpush1.bf16.msra.mxu0 0
      %1211 = vmatprep.subr.bf16.mxu0 0
      %1212 = vmatpush1.bf16.msra.mxu0 0
      %1213 = vmatprep.subr.bf16.mxu0 0
      %1214 = vmatpush1.bf16.msra.mxu0 0
      %1215 = vmatprep.subr.bf16.mxu0 0
      %1216 = vmatpush1.bf16.msra.mxu0 0
      %1217 = vmatprep.mubr.bf16.mxu0 %v987
      %1218 = vmatmul.mubr.bf16.gmra.mrb[0].mxu0 %v736
      %v1219 = vpop.f32.mrb[0].mxu0
      %v1220 = vadd.f32 0.0, %v1219
      %v1221 = vpop.f32.mrb[0].mxu0
      %v1222 = vpop.f32.mrb[0].mxu0
      %v1223 = vadd.f32 0.0, %v1222
      %v1224 = vpop.f32.mrb[0].mxu0
      %1225 = vmatprep.mubr.bf16.mxu0 %v990
      %1226 = vmatmul.mubr.bf16.gmra.mrb[0].mxu0 %v738
      %v1227 = vpop.f32.mrb[0].mxu0
      %v1228 = vadd.f32 0.0, %v1227
      %v1229 = vpop.f32.mrb[0].mxu0
      %v1230 = vpop.f32.mrb[0].mxu0
      %v1231 = vadd.f32 0.0, %v1230
      %v1232 = vpop.f32.mrb[0].mxu0
      %1233 = vmatprep.mubr.bf16.mxu0 %v993
      %1234 = vmatmul.mubr.bf16.gmra.mrb[0].mxu0 %v740
      %v1235 = vpop.f32.mrb[0].mxu0
      %v1236 = vadd.f32 0.0, %v1235
      %v1237 = vpop.f32.mrb[0].mxu0
      %v1238 = vpop.f32.mrb[0].mxu0
      %v1239 = vadd.f32 0.0, %v1238
      %v1240 = vpop.f32.mrb[0].mxu0
      %1241 = vmatprep.mubr.bf16.mxu0 %v996
      %1242 = vmatmul.mubr.bf16.gmra.mrb[0].mxu0 %v742
      %v1243 = vpop.f32.mrb[0].mxu0
      %v1244 = vadd.f32 0.0, %v1243
      %v1245 = vpop.f32.mrb[0].mxu0
      %v1246 = vpop.f32.mrb[0].mxu0
      %v1247 = vadd.f32 0.0, %v1246
      %v1248 = vpop.f32.mrb[0].mxu0
      %1249 = vmatprep.mubr.bf16.mxu0 %v999
      %1250 = vmatmul.mubr.bf16.gmra.mrb[0].mxu0 %v744
      %v1251 = vpop.f32.mrb[0].mxu0
      %v1252 = vadd.f32 0.0, %v1251
      %v1253 = vpop.f32.mrb[0].mxu0
      %v1254 = vpop.f32.mrb[0].mxu0
      %v1255 = vadd.f32 0.0, %v1254
      %v1256 = vpop.f32.mrb[0].mxu0
      %1257 = vmatprep.mubr.bf16.mxu0 %v1002
      %1258 = vmatmul.mubr.bf16.gmra.mrb[0].mxu0 %v746
      %v1259 = vpop.f32.mrb[0].mxu0
      %v1260 = vadd.f32 0.0, %v1259
      %v1261 = vpop.f32.mrb[0].mxu0
      %v1262 = vpop.f32.mrb[0].mxu0
      %v1263 = vadd.f32 0.0, %v1262
      %v1264 = vpop.f32.mrb[0].mxu0
      %1265 = vmatprep.mubr.bf16.mxu0 %v1005
      %1266 = vmatmul.mubr.bf16.gmra.mrb[0].mxu0 %v748
      %v1267 = vpop.f32.mrb[0].mxu0
      %v1268 = vadd.f32 0.0, %v1267
      %v1269 = vpop.f32.mrb[0].mxu0
      %v1270 = vpop.f32.mrb[0].mxu0
      %v1271 = vadd.f32 0.0, %v1270
      %v1272 = vpop.f32.mrb[0].mxu0
      %1273 = vmatprep.mubr.bf16.mxu0 %v1008
      %1274 = vmatmul.mubr.bf16.gmra.mrb[0].mxu0 %v750
      %v1275 = vpop.f32.mrb[0].mxu0
      %v1276 = vadd.f32 0.0, %v1275
      %v1277 = vpop.f32.mrb[0].mxu0
      %v1278 = vpop.f32.mrb[0].mxu0
      %v1279 = vadd.f32 0.0, %v1278
      %v1280 = vpop.f32.mrb[0].mxu0
      %1281 = vmatprep.mubr.bf16.mxu0 %v1011
      %1282 = vmatmul.mubr.bf16.gmra.mrb[0].mxu0 %v752
      %v1283 = vpop.f32.mrb[0].mxu0
      %v1284 = vadd.f32 0.0, %v1283
      %v1285 = vpop.f32.mrb[0].mxu0
      %v1286 = vpop.f32.mrb[0].mxu0
      %v1287 = vadd.f32 0.0, %v1286
      %v1288 = vpop.f32.mrb[0].mxu0
      %1289 = vmatprep.mubr.bf16.mxu0 %v1014
      %1290 = vmatmul.mubr.bf16.gmra.mrb[0].mxu0 %v754
      %v1291 = vpop.f32.mrb[0].mxu0
      %v1292 = vadd.f32 0.0, %v1291
      %v1293 = vpop.f32.mrb[0].mxu0
      %v1294 = vpop.f32.mrb[0].mxu0
      %v1295 = vadd.f32 0.0, %v1294
      %v1296 = vpop.f32.mrb[0].mxu0
      %1297 = vmatprep.mubr.bf16.mxu0 %v1017
      %1298 = vmatmul.mubr.bf16.gmra.mrb[0].mxu0 %v756
      %v1299 = vpop.f32.mrb[0].mxu0
      %v1300 = vadd.f32 0.0, %v1299
      %v1301 = vpop.f32.mrb[0].mxu0
      %v1302 = vpop.f32.mrb[0].mxu0
      %v1303 = vadd.f32 0.0, %v1302
      %v1304 = vpop.f32.mrb[0].mxu0
      %1305 = vmatprep.mubr.bf16.mxu0 %v1020
      %1306 = vmatmul.mubr.bf16.gmra.mrb[0].mxu0 %v758
      %v1307 = vpop.f32.mrb[0].mxu0
      %v1308 = vadd.f32 0.0, %v1307
      %v1309 = vpop.f32.mrb[0].mxu0
      %v1310 = vpop.f32.mrb[0].mxu0
      %v1311 = vadd.f32 0.0, %v1310
      %v1312 = vpop.f32.mrb[0].mxu0
      %1313 = vmatprep.mubr.bf16.mxu0 %v1023
      %1314 = vmatmul.mubr.bf16.gmra.mrb[0].mxu0 %v760
      %v1315 = vpop.f32.mrb[0].mxu0
      %v1316 = vadd.f32 0.0, %v1315
      %v1317 = vpop.f32.mrb[0].mxu0
      %v1318 = vpop.f32.mrb[0].mxu0
      %v1319 = vadd.f32 0.0, %v1318
      %v1320 = vpop.f32.mrb[0].mxu0
      %1321 = vmatprep.mubr.bf16.mxu0 %v1026
      %1322 = vmatmul.mubr.bf16.gmra.mrb[0].mxu0 %v762
      %v1323 = vpop.f32.mrb[0].mxu0
      %v1324 = vadd.f32 0.0, %v1323
      %v1325 = vpop.f32.mrb[0].mxu0
      %v1326 = vpop.f32.mrb[0].mxu0
      %v1327 = vadd.f32 0.0, %v1326
      %v1328 = vpop.f32.mrb[0].mxu0
      %1329 = vmatprep.mubr.bf16.mxu0 %v1029
      %1330 = vmatmul.mubr.bf16.gmra.mrb[0].mxu0 %v764
      %v1331 = vpop.f32.mrb[0].mxu0
      %v1332 = vadd.f32 0.0, %v1331
      %v1333 = vpop.f32.mrb[0].mxu0
      %v1334 = vpop.f32.mrb[0].mxu0
      %v1335 = vadd.f32 0.0, %v1334
      %v1336 = vpop.f32.mrb[0].mxu0
      %1337 = vmatprep.mubr.bf16.mxu0 %v1032
      %1338 = vmatmul.mubr.bf16.gmra.mrb[0].mxu0 %v766
      %v1339 = vpop.f32.mrb[0].mxu0
      %v1340 = vadd.f32 0.0, %v1339
      %v1341 = vpop.f32.mrb[0].mxu0
      %v1342 = vpop.f32.mrb[0].mxu0
      %v1343 = vadd.f32 0.0, %v1342
      %v1344 = vpop.f32.mrb[0].mxu0
      %1345 = vmatprep.mubr.bf16.mxu0 %v1035
      %1346 = vmatmul.mubr.bf16.gmra.mrb[0].mxu0 %v768
      %v1347 = vpop.f32.mrb[0].mxu0
      %v1348 = vadd.f32 0.0, %v1347
      %v1349 = vpop.f32.mrb[0].mxu0
      %v1350 = vpop.f32.mrb[0].mxu0
      %v1351 = vadd.f32 0.0, %v1350
      %v1352 = vpop.f32.mrb[0].mxu0
      %1353 = vmatprep.mubr.bf16.mxu0 %v1038
      %1354 = vmatmul.mubr.bf16.gmra.mrb[0].mxu0 %v770
      %v1355 = vpop.f32.mrb[0].mxu0
      %v1356 = vadd.f32 0.0, %v1355
      %v1357 = vpop.f32.mrb[0].mxu0
      %v1358 = vpop.f32.mrb[0].mxu0
      %v1359 = vadd.f32 0.0, %v1358
      %v1360 = vpop.f32.mrb[0].mxu0
      %1361 = vmatprep.mubr.bf16.mxu0 %v1041
      %1362 = vmatmul.mubr.bf16.gmra.mrb[0].mxu0 %v772
      %v1363 = vpop.f32.mrb[0].mxu0
      %v1364 = vadd.f32 0.0, %v1363
      %v1365 = vpop.f32.mrb[0].mxu0
      %v1366 = vpop.f32.mrb[0].mxu0
      %v1367 = vadd.f32 0.0, %v1366
      %v1368 = vpop.f32.mrb[0].mxu0
      %1369 = vmatprep.mubr.bf16.mxu0 %v1044
      %1370 = vmatmul.mubr.bf16.gmra.mrb[0].mxu0 %v774
      %v1371 = vpop.f32.mrb[0].mxu0
      %v1372 = vadd.f32 0.0, %v1371
      %v1373 = vpop.f32.mrb[0].mxu0
      %v1374 = vpop.f32.mrb[0].mxu0
      %v1375 = vadd.f32 0.0, %v1374
      %v1376 = vpop.f32.mrb[0].mxu0
      %1377 = vmatprep.mubr.bf16.mxu0 %v1047
      %1378 = vmatmul.mubr.bf16.gmra.mrb[0].mxu0 %v776
      %v1379 = vpop.f32.mrb[0].mxu0
      %v1380 = vadd.f32 0.0, %v1379
      %v1381 = vpop.f32.mrb[0].mxu0
      %v1382 = vpop.f32.mrb[0].mxu0
      %v1383 = vadd.f32 0.0, %v1382
      %v1384 = vpop.f32.mrb[0].mxu0
      %1385 = vmatprep.mubr.bf16.mxu0 %v1050
      %1386 = vmatmul.mubr.bf16.gmra.mrb[0].mxu0 %v778
      %v1387 = vpop.f32.mrb[0].mxu0
      %v1388 = vadd.f32 0.0, %v1387
      %v1389 = vpop.f32.mrb[0].mxu0
      %v1390 = vpop.f32.mrb[0].mxu0
      %v1391 = vadd.f32 0.0, %v1390
      %v1392 = vpop.f32.mrb[0].mxu0
      %1393 = vmatprep.mubr.bf16.mxu0 %v1053
      %1394 = vmatmul.mubr.bf16.gmra.mrb[0].mxu0 %v780
      %v1395 = vpop.f32.mrb[0].mxu0
      %v1396 = vadd.f32 0.0, %v1395
      %v1397 = vpop.f32.mrb[0].mxu0
      %v1398 = vpop.f32.mrb[0].mxu0
      %v1399 = vadd.f32 0.0, %v1398
      %v1400 = vpop.f32.mrb[0].mxu0
      %1401 = vmatprep.mubr.bf16.mxu0 %v1056
      %1402 = vmatmul.mubr.bf16.gmra.mrb[0].mxu0 %v782
      %v1403 = vpop.f32.mrb[0].mxu0
      %v1404 = vadd.f32 0.0, %v1403
      %v1405 = vpop.f32.mrb[0].mxu0
      %v1406 = vpop.f32.mrb[0].mxu0
      %v1407 = vadd.f32 0.0, %v1406
      %v1408 = vpop.f32.mrb[0].mxu0
      %1409 = vmatprep.mubr.bf16.mxu0 %v1059
      %1410 = vmatmul.mubr.bf16.gmra.mrb[0].mxu0 %v784
      %v1411 = vpop.f32.mrb[0].mxu0
      %v1412 = vadd.f32 0.0, %v1411
      %v1413 = vpop.f32.mrb[0].mxu0
      %v1414 = vpop.f32.mrb[0].mxu0
      %v1415 = vadd.f32 0.0, %v1414
      %v1416 = vpop.f32.mrb[0].mxu0
      %1417 = vmatprep.mubr.bf16.mxu0 %v1062
      %1418 = vmatmul.mubr.bf16.gmra.mrb[0].mxu0 %v786
      %v1419 = vpop.f32.mrb[0].mxu0
      %v1420 = vadd.f32 0.0, %v1419
      %v1421 = vpop.f32.mrb[0].mxu0
      %v1422 = vpop.f32.mrb[0].mxu0
      %v1423 = vadd.f32 0.0, %v1422
      %v1424 = vpop.f32.mrb[0].mxu0
      %1425 = vmatprep.mubr.bf16.mxu0 %v1065
      %1426 = vmatmul.mubr.bf16.gmra.mrb[0].mxu0 %v788
      %v1427 = vpop.f32.mrb[0].mxu0
      %v1428 = vadd.f32 0.0, %v1427
      %v1429 = vpop.f32.mrb[0].mxu0
      %v1430 = vpop.f32.mrb[0].mxu0
      %v1431 = vadd.f32 0.0, %v1430
      %v1432 = vpop.f32.mrb[0].mxu0
      %1433 = vmatprep.mubr.bf16.mxu0 %v1068
      %1434 = vmatmul.mubr.bf16.gmra.mrb[0].mxu0 %v790
      %v1435 = vpop.f32.mrb[0].mxu0
      %v1436 = vadd.f32 0.0, %v1435
      %v1437 = vpop.f32.mrb[0].mxu0
      %v1438 = vpop.f32.mrb[0].mxu0
      %v1439 = vadd.f32 0.0, %v1438
      %v1440 = vpop.f32.mrb[0].mxu0
      %1441 = vmatprep.mubr.bf16.mxu0 %v1071
      %1442 = vmatmul.mubr.bf16.gmra.mrb[0].mxu0 %v792
      %v1443 = vpop.f32.mrb[0].mxu0
      %v1444 = vadd.f32 0.0, %v1443
      %v1445 = vpop.f32.mrb[0].mxu0
      %v1446 = vpop.f32.mrb[0].mxu0
      %v1447 = vadd.f32 0.0, %v1446
      %v1448 = vpop.f32.mrb[0].mxu0
      %1449 = vmatprep.mubr.bf16.mxu0 %v1074
      %1450 = vmatmul.mubr.bf16.gmra.mrb[0].mxu0 %v794
      %v1451 = vpop.f32.mrb[0].mxu0
      %v1452 = vadd.f32 0.0, %v1451
      %v1453 = vpop.f32.mrb[0].mxu0
      %v1454 = vpop.f32.mrb[0].mxu0
      %v1455 = vadd.f32 0.0, %v1454
      %v1456 = vpop.f32.mrb[0].mxu0
      %1457 = vmatprep.mubr.bf16.mxu0 %v1077
      %1458 = vmatmul.mubr.bf16.gmra.mrb[0].mxu0 %v796
      %v1459 = vpop.f32.mrb[0].mxu0
      %v1460 = vadd.f32 0.0, %v1459
      %v1461 = vpop.f32.mrb[0].mxu0
      %v1462 = vpop.f32.mrb[0].mxu0
      %v1463 = vadd.f32 0.0, %v1462
      %v1464 = vpop.f32.mrb[0].mxu0
      %1465 = vmatprep.mubr.bf16.mxu0 %v1080
      %1466 = vmatmul.mubr.bf16.gmra.mrb[0].mxu0 %v798
      %v1467 = vpop.f32.mrb[0].mxu0
      %v1468 = vadd.f32 0.0, %v1467
      %v1469 = vpop.f32.mrb[0].mxu0
      %v1470 = vpop.f32.mrb[0].mxu0
      %v1471 = vadd.f32 0.0, %v1470
      %v1472 = vpop.f32.mrb[0].mxu0
      %1473 = vmatprep.mubr.bf16.mxu0 %v1083
      %1474 = vmatmul.mubr.bf16.gmra.mrb[0].mxu0 %v800
      %v1475 = vpop.f32.mrb[0].mxu0
      %v1476 = vadd.f32 0.0, %v1475
      %v1477 = vpop.f32.mrb[0].mxu0
      %v1478 = vpop.f32.mrb[0].mxu0
      %v1479 = vadd.f32 0.0, %v1478
      %v1480 = vpop.f32.mrb[0].mxu0
      %1481 = vmatprep.mubr.bf16.mxu0 %v1086
      %1482 = vmatmul.mubr.bf16.gmra.mrb[0].mxu0 %v802
      %v1483 = vpop.f32.mrb[0].mxu0
      %v1484 = vadd.f32 0.0, %v1483
      %v1485 = vpop.f32.mrb[0].mxu0
      %v1486 = vpop.f32.mrb[0].mxu0
      %v1487 = vadd.f32 0.0, %v1486
      %v1488 = vpop.f32.mrb[0].mxu0
      %1489 = vmatprep.mubr.bf16.mxu0 %v1089
      %1490 = vmatmul.mubr.bf16.gmra.mrb[0].mxu0 %v804
      %v1491 = vpop.f32.mrb[0].mxu0
      %v1492 = vadd.f32 0.0, %v1491
      %v1493 = vpop.f32.mrb[0].mxu0
      %v1494 = vpop.f32.mrb[0].mxu0
      %v1495 = vadd.f32 0.0, %v1494
      %v1496 = vpop.f32.mrb[0].mxu0
      %1497 = vmatprep.mubr.bf16.mxu0 %v1092
      %1498 = vmatmul.mubr.bf16.gmra.mrb[0].mxu0 %v806
      %v1499 = vpop.f32.mrb[0].mxu0
      %v1500 = vadd.f32 0.0, %v1499
      %v1501 = vpop.f32.mrb[0].mxu0
      %v1502 = vpop.f32.mrb[0].mxu0
      %v1503 = vadd.f32 0.0, %v1502
      %v1504 = vpop.f32.mrb[0].mxu0
      %1505 = vmatprep.mubr.bf16.mxu0 %v1095
      %1506 = vmatmul.mubr.bf16.gmra.mrb[0].mxu0 %v808
      %v1507 = vpop.f32.mrb[0].mxu0
      %v1508 = vadd.f32 0.0, %v1507
      %v1509 = vpop.f32.mrb[0].mxu0
      %v1510 = vpop.f32.mrb[0].mxu0
      %v1511 = vadd.f32 0.0, %v1510
      %v1512 = vpop.f32.mrb[0].mxu0
      %1513 = vmatprep.mubr.bf16.mxu0 %v1098
      %1514 = vmatmul.mubr.bf16.gmra.mrb[0].mxu0 %v810
      %v1515 = vpop.f32.mrb[0].mxu0
      %v1516 = vadd.f32 0.0, %v1515
      %v1517 = vpop.f32.mrb[0].mxu0
      %v1518 = vpop.f32.mrb[0].mxu0
      %v1519 = vadd.f32 0.0, %v1518
      %v1520 = vpop.f32.mrb[0].mxu0
      %1521 = vmatprep.mubr.bf16.mxu0 %v1101
      %1522 = vmatmul.mubr.bf16.gmra.mrb[0].mxu0 %v812
      %v1523 = vpop.f32.mrb[0].mxu0
      %v1524 = vadd.f32 0.0, %v1523
      %v1525 = vpop.f32.mrb[0].mxu0
      %v1526 = vpop.f32.mrb[0].mxu0
      %v1527 = vadd.f32 0.0, %v1526
      %v1528 = vpop.f32.mrb[0].mxu0
      %1529 = vmatprep.mubr.bf16.mxu0 %v1104
      %1530 = vmatmul.mubr.bf16.gmra.mrb[0].mxu0 %v814
      %v1531 = vpop.f32.mrb[0].mxu0
      %v1532 = vadd.f32 0.0, %v1531
      %v1533 = vpop.f32.mrb[0].mxu0
      %v1534 = vpop.f32.mrb[0].mxu0
      %v1535 = vadd.f32 0.0, %v1534
      %v1536 = vpop.f32.mrb[0].mxu0
      %1537 = vmatprep.mubr.bf16.mxu0 %v1107
      %1538 = vmatmul.mubr.bf16.gmra.mrb[0].mxu0 %v816
      %v1539 = vpop.f32.mrb[0].mxu0
      %v1540 = vadd.f32 0.0, %v1539
      %v1541 = vpop.f32.mrb[0].mxu0
      %v1542 = vpop.f32.mrb[0].mxu0
      %v1543 = vadd.f32 0.0, %v1542
      %v1544 = vpop.f32.mrb[0].mxu0
      %1545 = vmatprep.mubr.bf16.mxu0 %v1110
      %1546 = vmatmul.mubr.bf16.gmra.mrb[0].mxu0 %v818
      %v1547 = vpop.f32.mrb[0].mxu0
      %v1548 = vadd.f32 0.0, %v1547
      %v1549 = vpop.f32.mrb[0].mxu0
      %v1550 = vpop.f32.mrb[0].mxu0
      %v1551 = vadd.f32 0.0, %v1550
      %v1552 = vpop.f32.mrb[0].mxu0
      %1553 = vmatprep.mubr.bf16.mxu0 %v1113
      %1554 = vmatmul.mubr.bf16.gmra.mrb[0].mxu0 %v820
      %v1555 = vpop.f32.mrb[0].mxu0
      %v1556 = vadd.f32 0.0, %v1555
      %v1557 = vpop.f32.mrb[0].mxu0
      %v1558 = vpop.f32.mrb[0].mxu0
      %v1559 = vadd.f32 0.0, %v1558
      %v1560 = vpop.f32.mrb[0].mxu0
      %1561 = vmatprep.mubr.bf16.mxu0 %v1116
      %1562 = vmatmul.mubr.bf16.gmra.mrb[0].mxu0 %v822
      %v1563 = vpop.f32.mrb[0].mxu0
      %v1564 = vadd.f32 0.0, %v1563
      %v1565 = vpop.f32.mrb[0].mxu0
      %v1566 = vpop.f32.mrb[0].mxu0
      %v1567 = vadd.f32 0.0, %v1566
      %v1568 = vpop.f32.mrb[0].mxu0
      %1569 = vmatprep.mubr.bf16.mxu0 %v1119
      %1570 = vmatmul.mubr.bf16.gmra.mrb[0].mxu0 %v824
      %v1571 = vpop.f32.mrb[0].mxu0
      %v1572 = vadd.f32 0.0, %v1571
      %v1573 = vpop.f32.mrb[0].mxu0
      %v1574 = vpop.f32.mrb[0].mxu0
      %v1575 = vadd.f32 0.0, %v1574
      %v1576 = vpop.f32.mrb[0].mxu0
      %1577 = vmatprep.mubr.bf16.mxu0 %v1122
      %1578 = vmatmul.mubr.bf16.gmra.mrb[0].mxu0 %v826
      %v1579 = vpop.f32.mrb[0].mxu0
      %v1580 = vadd.f32 0.0, %v1579
      %v1581 = vpop.f32.mrb[0].mxu0
      %v1582 = vpop.f32.mrb[0].mxu0
      %v1583 = vadd.f32 0.0, %v1582
      %v1584 = vpop.f32.mrb[0].mxu0
      %1585 = vmatprep.mubr.bf16.mxu0 %v1125
      %1586 = vmatmul.mubr.bf16.gmra.mrb[0].mxu0 %v828
      %v1587 = vpop.f32.mrb[0].mxu0
      %v1588 = vadd.f32 0.0, %v1587
      %v1589 = vpop.f32.mrb[0].mxu0
      %v1590 = vpop.f32.mrb[0].mxu0
      %v1591 = vadd.f32 0.0, %v1590
      %v1592 = vpop.f32.mrb[0].mxu0
      %1593 = vmatprep.mubr.bf16.mxu0 %v1128
      %1594 = vmatmul.mubr.bf16.gmra.mrb[0].mxu0 %v830
      %v1595 = vpop.f32.mrb[0].mxu0
      %v1596 = vadd.f32 0.0, %v1595
      %v1597 = vpop.f32.mrb[0].mxu0
      %v1598 = vpop.f32.mrb[0].mxu0
      %v1599 = vadd.f32 0.0, %v1598
      %v1600 = vpop.f32.mrb[0].mxu0
      %1601 = vmatprep.mubr.bf16.mxu0 %v1131
      %1602 = vmatmul.mubr.bf16.gmra.mrb[0].mxu0 %v832
      %v1603 = vpop.f32.mrb[0].mxu0
      %v1604 = vadd.f32 0.0, %v1603
      %v1605 = vpop.f32.mrb[0].mxu0
      %v1606 = vpop.f32.mrb[0].mxu0
      %v1607 = vadd.f32 0.0, %v1606
      %v1608 = vpop.f32.mrb[0].mxu0
      %1609 = vmatprep.mubr.bf16.mxu0 %v1134
      %1610 = vmatmul.mubr.bf16.gmra.mrb[0].mxu0 %v834
      %v1611 = vpop.f32.mrb[0].mxu0
      %v1612 = vadd.f32 0.0, %v1611
      %v1613 = vpop.f32.mrb[0].mxu0
      %v1614 = vpop.f32.mrb[0].mxu0
      %v1615 = vadd.f32 0.0, %v1614
      %v1616 = vpop.f32.mrb[0].mxu0
      %1617 = vmatprep.mubr.bf16.mxu0 %v1137
      %1618 = vmatmul.mubr.bf16.gmra.mrb[0].mxu0 %v836
      %v1619 = vpop.f32.mrb[0].mxu0
      %v1620 = vadd.f32 0.0, %v1619
      %v1621 = vpop.f32.mrb[0].mxu0
      %v1622 = vpop.f32.mrb[0].mxu0
      %v1623 = vadd.f32 0.0, %v1622
      %v1624 = vpop.f32.mrb[0].mxu0
      %1625 = vmatprep.mubr.bf16.mxu0 %v1140
      %1626 = vmatmul.mubr.bf16.gmra.mrb[0].mxu0 %v838
      %v1627 = vpop.f32.mrb[0].mxu0
      %v1628 = vadd.f32 0.0, %v1627
      %v1629 = vpop.f32.mrb[0].mxu0
      %v1630 = vpop.f32.mrb[0].mxu0
      %v1631 = vadd.f32 0.0, %v1630
      %v1632 = vpop.f32.mrb[0].mxu0
      %1633 = vmatprep.mubr.bf16.mxu0 %v1143
      %1634 = vmatmul.mubr.bf16.gmra.mrb[0].mxu0 %v840
      %v1635 = vpop.f32.mrb[0].mxu0
      %v1636 = vadd.f32 0.0, %v1635
      %v1637 = vpop.f32.mrb[0].mxu0
      %v1638 = vpop.f32.mrb[0].mxu0
      %v1639 = vadd.f32 0.0, %v1638
      %v1640 = vpop.f32.mrb[0].mxu0
      %1641 = vmatprep.mubr.bf16.mxu0 %v1146
      %1642 = vmatmul.mubr.bf16.gmra.mrb[0].mxu0 %v842
      %v1643 = vpop.f32.mrb[0].mxu0
      %v1644 = vadd.f32 0.0, %v1643
      %v1645 = vpop.f32.mrb[0].mxu0
      %v1646 = vpop.f32.mrb[0].mxu0
      %v1647 = vadd.f32 0.0, %v1646
      %v1648 = vpop.f32.mrb[0].mxu0
      %1649 = vmatprep.mubr.bf16.mxu0 %v1149
      %1650 = vmatmul.mubr.bf16.gmra.mrb[0].mxu0 %v844
      %v1651 = vpop.f32.mrb[0].mxu0
      %v1652 = vadd.f32 0.0, %v1651
      %v1653 = vpop.f32.mrb[0].mxu0
      %v1654 = vpop.f32.mrb[0].mxu0
      %v1655 = vadd.f32 0.0, %v1654
      %v1656 = vpop.f32.mrb[0].mxu0
      %1657 = vmatprep.mubr.bf16.mxu0 %v1152
      %1658 = vmatmul.mubr.bf16.gmra.mrb[0].mxu0 %v846
      %v1659 = vpop.f32.mrb[0].mxu0
      %v1660 = vadd.f32 0.0, %v1659
      %v1661 = vpop.f32.mrb[0].mxu0
      %v1662 = vpop.f32.mrb[0].mxu0
      %v1663 = vadd.f32 0.0, %v1662
      %v1664 = vpop.f32.mrb[0].mxu0
      %1665 = vmatprep.mubr.bf16.mxu0 %v1155
      %1666 = vmatmul.mubr.bf16.gmra.mrb[0].mxu0 %v848
      %v1667 = vpop.f32.mrb[0].mxu0
      %v1668 = vadd.f32 0.0, %v1667
      %v1669 = vpop.f32.mrb[0].mxu0
      %v1670 = vpop.f32.mrb[0].mxu0
      %v1671 = vadd.f32 0.0, %v1670
      %v1672 = vpop.f32.mrb[0].mxu0
      %1673 = vmatprep.mubr.bf16.mxu0 %v1158
      %1674 = vmatmul.mubr.bf16.gmra.mrb[0].mxu0 %v850
      %v1675 = vpop.f32.mrb[0].mxu0
      %v1676 = vadd.f32 0.0, %v1675
      %v1677 = vpop.f32.mrb[0].mxu0
      %v1678 = vpop.f32.mrb[0].mxu0
      %v1679 = vadd.f32 0.0, %v1678
      %v1680 = vpop.f32.mrb[0].mxu0
      %1681 = vmatprep.mubr.bf16.mxu0 %v1161
      %1682 = vmatmul.mubr.bf16.gmra.mrb[0].mxu0 %v852
      %v1683 = vpop.f32.mrb[0].mxu0
      %v1684 = vadd.f32 0.0, %v1683
      %v1685 = vpop.f32.mrb[0].mxu0
      %v1686 = vpop.f32.mrb[0].mxu0
      %v1687 = vadd.f32 0.0, %v1686
      %v1688 = vpop.f32.mrb[0].mxu0
      %1689 = vmatprep.mubr.bf16.mxu0 %v1164
      %1690 = vmatmul.mubr.bf16.gmra.mrb[0].mxu0 %v854
      %v1691 = vpop.f32.mrb[0].mxu0
      %v1692 = vadd.f32 0.0, %v1691
      %v1693 = vpop.f32.mrb[0].mxu0
      %v1694 = vpop.f32.mrb[0].mxu0
      %v1695 = vadd.f32 0.0, %v1694
      %v1696 = vpop.f32.mrb[0].mxu0
      %1697 = vmatprep.mubr.bf16.mxu0 %v1167
      %1698 = vmatmul.mubr.bf16.gmra.mrb[0].mxu0 %v856
      %v1699 = vpop.f32.mrb[0].mxu0
      %v1700 = vadd.f32 0.0, %v1699
      %v1701 = vpop.f32.mrb[0].mxu0
      %v1702 = vpop.f32.mrb[0].mxu0
      %v1703 = vadd.f32 0.0, %v1702
      %v1704 = vpop.f32.mrb[0].mxu0
      %1705 = vmatprep.mubr.bf16.mxu0 %v1170
      %1706 = vmatmul.mubr.bf16.gmra.mrb[0].mxu0 %v858
      %v1707 = vpop.f32.mrb[0].mxu0
      %v1708 = vadd.f32 0.0, %v1707
      %v1709 = vpop.f32.mrb[0].mxu0
      %v1710 = vpop.f32.mrb[0].mxu0
      %v1711 = vadd.f32 0.0, %v1710
      %v1712 = vpop.f32.mrb[0].mxu0
      %1713 = vmatprep.mubr.bf16.mxu0 %v1173
      %1714 = vmatmul.mubr.bf16.gmra.mrb[0].mxu0 %v860
      %v1715 = vpop.f32.mrb[0].mxu0
      %v1716 = vadd.f32 0.0, %v1715
      %v1717 = vpop.f32.mrb[0].mxu0
      %v1718 = vpop.f32.mrb[0].mxu0
      %v1719 = vadd.f32 0.0, %v1718
      %v1720 = vpop.f32.mrb[0].mxu0
      %1721 = vmatprep.mubr.bf16.mxu0 %v1176
      %1722 = vmatmul.mubr.bf16.gmra.mrb[0].mxu0 %v862
      %v1723 = vpop.f32.mrb[0].mxu0
      %v1724 = vadd.f32 0.0, %v1723
      %v1725 = vpop.f32.mrb[0].mxu0
      %v1726 = vpop.f32.mrb[0].mxu0
      %v1727 = vadd.f32 0.0, %v1726
      %v1728 = vpop.f32.mrb[0].mxu0
      %1729 = vdwg.mxu0
      %v1730 = vld [vmem:[%s2] sm:$0x1]
      %v1732 = vlaneseq
      %v1733 = vshrl.u32 %v1732, 7
      %v1734 = vsub.s32 0, %v1733
      %v1735 = vrot.slane %v1730, %v1734
      %v1737 = vmul.f32 %v1220, %v1735
      %v1738 = vmul.f32 %v1223, %v1735
      %v1739 = vmul.f32 %v1228, %v1735
      %v1740 = vmul.f32 %v1231, %v1735
      %v1741 = vmul.f32 %v1236, %v1735
      %v1742 = vmul.f32 %v1239, %v1735
      %v1743 = vmul.f32 %v1244, %v1735
      %v1744 = vmul.f32 %v1247, %v1735
      %v1745 = vmul.f32 %v1252, %v1735
      %v1746 = vmul.f32 %v1255, %v1735
      %v1747 = vmul.f32 %v1260, %v1735
      %v1748 = vmul.f32 %v1263, %v1735
      %v1749 = vmul.f32 %v1268, %v1735
      %v1750 = vmul.f32 %v1271, %v1735
      %v1751 = vmul.f32 %v1276, %v1735
      %v1752 = vmul.f32 %v1279, %v1735
      %v1753 = vmul.f32 %v1284, %v1735
      %v1754 = vmul.f32 %v1287, %v1735
      %v1755 = vmul.f32 %v1292, %v1735
      %v1756 = vmul.f32 %v1295, %v1735
      %v1757 = vmul.f32 %v1300, %v1735
      %v1758 = vmul.f32 %v1303, %v1735
      %v1759 = vmul.f32 %v1308, %v1735
      %v1760 = vmul.f32 %v1311, %v1735
      %v1761 = vmul.f32 %v1316, %v1735
      %v1762 = vmul.f32 %v1319, %v1735
      %v1763 = vmul.f32 %v1324, %v1735
      %v1764 = vmul.f32 %v1327, %v1735
      %v1765 = vmul.f32 %v1332, %v1735
      %v1766 = vmul.f32 %v1335, %v1735
      %v1767 = vmul.f32 %v1340, %v1735
      %v1768 = vmul.f32 %v1343, %v1735
      %v1769 = vmul.f32 %v1348, %v1735
      %v1770 = vmul.f32 %v1351, %v1735
      %v1771 = vmul.f32 %v1356, %v1735
      %v1772 = vmul.f32 %v1359, %v1735
      %v1773 = vmul.f32 %v1364, %v1735
      %v1774 = vmul.f32 %v1367, %v1735
      %v1775 = vmul.f32 %v1372, %v1735
      %v1776 = vmul.f32 %v1375, %v1735
      %v1777 = vmul.f32 %v1380, %v1735
      %v1778 = vmul.f32 %v1383, %v1735
      %v1779 = vmul.f32 %v1388, %v1735
      %v1780 = vmul.f32 %v1391, %v1735
      %v1781 = vmul.f32 %v1396, %v1735
      %v1782 = vmul.f32 %v1399, %v1735
      %v1783 = vmul.f32 %v1404, %v1735
      %v1784 = vmul.f32 %v1407, %v1735
      %v1785 = vmul.f32 %v1412, %v1735
      %v1786 = vmul.f32 %v1415, %v1735
      %v1787 = vmul.f32 %v1420, %v1735
      %v1788 = vmul.f32 %v1423, %v1735
      %v1789 = vmul.f32 %v1428, %v1735
      %v1790 = vmul.f32 %v1431, %v1735
      %v1791 = vmul.f32 %v1436, %v1735
      %v1792 = vmul.f32 %v1439, %v1735
      %v1793 = vmul.f32 %v1444, %v1735
      %v1794 = vmul.f32 %v1447, %v1735
      %v1795 = vmul.f32 %v1452, %v1735
      %v1796 = vmul.f32 %v1455, %v1735
      %v1797 = vmul.f32 %v1460, %v1735
      %v1798 = vmul.f32 %v1463, %v1735
      %v1799 = vmul.f32 %v1468, %v1735
      %v1800 = vmul.f32 %v1471, %v1735
      %v1801 = vmul.f32 %v1476, %v1735
      %v1802 = vmul.f32 %v1479, %v1735
      %v1803 = vmul.f32 %v1484, %v1735
      %v1804 = vmul.f32 %v1487, %v1735
      %v1805 = vmul.f32 %v1492, %v1735
      %v1806 = vmul.f32 %v1495, %v1735
      %v1807 = vmul.f32 %v1500, %v1735
      %v1808 = vmul.f32 %v1503, %v1735
      %v1809 = vmul.f32 %v1508, %v1735
      %v1810 = vmul.f32 %v1511, %v1735
      %v1811 = vmul.f32 %v1516, %v1735
      %v1812 = vmul.f32 %v1519, %v1735
      %v1813 = vmul.f32 %v1524, %v1735
      %v1814 = vmul.f32 %v1527, %v1735
      %v1815 = vmul.f32 %v1532, %v1735
      %v1816 = vmul.f32 %v1535, %v1735
      %v1817 = vmul.f32 %v1540, %v1735
      %v1818 = vmul.f32 %v1543, %v1735
      %v1819 = vmul.f32 %v1548, %v1735
      %v1820 = vmul.f32 %v1551, %v1735
      %v1821 = vmul.f32 %v1556, %v1735
      %v1822 = vmul.f32 %v1559, %v1735
      %v1823 = vmul.f32 %v1564, %v1735
      %v1824 = vmul.f32 %v1567, %v1735
      %v1825 = vmul.f32 %v1572, %v1735
      %v1826 = vmul.f32 %v1575, %v1735
      %v1827 = vmul.f32 %v1580, %v1735
      %v1828 = vmul.f32 %v1583, %v1735
      %v1829 = vmul.f32 %v1588, %v1735
      %v1830 = vmul.f32 %v1591, %v1735
      %v1831 = vmul.f32 %v1596, %v1735
      %v1832 = vmul.f32 %v1599, %v1735
      %v1833 = vmul.f32 %v1604, %v1735
      %v1834 = vmul.f32 %v1607, %v1735
      %v1835 = vmul.f32 %v1612, %v1735
      %v1836 = vmul.f32 %v1615, %v1735
      %v1837 = vmul.f32 %v1620, %v1735
      %v1838 = vmul.f32 %v1623, %v1735
      %v1839 = vmul.f32 %v1628, %v1735
      %v1840 = vmul.f32 %v1631, %v1735
      %v1841 = vmul.f32 %v1636, %v1735
      %v1842 = vmul.f32 %v1639, %v1735
      %v1843 = vmul.f32 %v1644, %v1735
      %v1844 = vmul.f32 %v1647, %v1735
      %v1845 = vmul.f32 %v1652, %v1735
      %v1846 = vmul.f32 %v1655, %v1735
      %v1847 = vmul.f32 %v1660, %v1735
      %v1848 = vmul.f32 %v1663, %v1735
      %v1849 = vmul.f32 %v1668, %v1735
      %v1850 = vmul.f32 %v1671, %v1735
      %v1851 = vmul.f32 %v1676, %v1735
      %v1852 = vmul.f32 %v1679, %v1735
      %v1853 = vmul.f32 %v1684, %v1735
      %v1854 = vmul.f32 %v1687, %v1735
      %v1855 = vmul.f32 %v1692, %v1735
      %v1856 = vmul.f32 %v1695, %v1735
      %v1857 = vmul.f32 %v1700, %v1735
      %v1858 = vmul.f32 %v1703, %v1735
      %v1859 = vmul.f32 %v1708, %v1735
      %v1860 = vmul.f32 %v1711, %v1735
      %v1861 = vmul.f32 %v1716, %v1735
      %v1862 = vmul.f32 %v1719, %v1735
      %v1863 = vmul.f32 %v1724, %v1735
      %v1864 = vmul.f32 %v1727, %v1735
      %v1865 = vld [vmem:[%s3] sm:$0x1]
      %v1867 = vlaneseq
      %v1868 = vshrl.u32 %v1867, 7
      %v1869 = vsub.s32 0, %v1868
      %v1870 = vrot.slane %v1865, %v1869
      %v1872 = vadd.f32 %v1737, %v1870
      %v1873 = vadd.f32 %v1738, %v1870
      %v1874 = vadd.f32 %v1739, %v1870
      %v1875 = vadd.f32 %v1740, %v1870
      %v1876 = vadd.f32 %v1741, %v1870
      %v1877 = vadd.f32 %v1742, %v1870
      %v1878 = vadd.f32 %v1743, %v1870
      %v1879 = vadd.f32 %v1744, %v1870
      %v1880 = vadd.f32 %v1745, %v1870
      %v1881 = vadd.f32 %v1746, %v1870
      %v1882 = vadd.f32 %v1747, %v1870
      %v1883 = vadd.f32 %v1748, %v1870
      %v1884 = vadd.f32 %v1749, %v1870
      %v1885 = vadd.f32 %v1750, %v1870
      %v1886 = vadd.f32 %v1751, %v1870
      %v1887 = vadd.f32 %v1752, %v1870
      %v1888 = vadd.f32 %v1753, %v1870
      %v1889 = vadd.f32 %v1754, %v1870
      %v1890 = vadd.f32 %v1755, %v1870
      %v1891 = vadd.f32 %v1756, %v1870
      %v1892 = vadd.f32 %v1757, %v1870
      %v1893 = vadd.f32 %v1758, %v1870
      %v1894 = vadd.f32 %v1759, %v1870
      %v1895 = vadd.f32 %v1760, %v1870
      %v1896 = vadd.f32 %v1761, %v1870
      %v1897 = vadd.f32 %v1762, %v1870
      %v1898 = vadd.f32 %v1763, %v1870
      %v1899 = vadd.f32 %v1764, %v1870
      %v1900 = vadd.f32 %v1765, %v1870
      %v1901 = vadd.f32 %v1766, %v1870
      %v1902 = vadd.f32 %v1767, %v1870
      %v1903 = vadd.f32 %v1768, %v1870
      %v1904 = vadd.f32 %v1769, %v1870
      %v1905 = vadd.f32 %v1770, %v1870
      %v1906 = vadd.f32 %v1771, %v1870
      %v1907 = vadd.f32 %v1772, %v1870
      %v1908 = vadd.f32 %v1773, %v1870
      %v1909 = vadd.f32 %v1774, %v1870
      %v1910 = vadd.f32 %v1775, %v1870
      %v1911 = vadd.f32 %v1776, %v1870
      %v1912 = vadd.f32 %v1777, %v1870
      %v1913 = vadd.f32 %v1778, %v1870
      %v1914 = vadd.f32 %v1779, %v1870
      %v1915 = vadd.f32 %v1780, %v1870
      %v1916 = vadd.f32 %v1781, %v1870
      %v1917 = vadd.f32 %v1782, %v1870
      %v1918 = vadd.f32 %v1783, %v1870
      %v1919 = vadd.f32 %v1784, %v1870
      %v1920 = vadd.f32 %v1785, %v1870
      %v1921 = vadd.f32 %v1786, %v1870
      %v1922 = vadd.f32 %v1787, %v1870
      %v1923 = vadd.f32 %v1788, %v1870
      %v1924 = vadd.f32 %v1789, %v1870
      %v1925 = vadd.f32 %v1790, %v1870
      %v1926 = vadd.f32 %v1791, %v1870
      %v1927 = vadd.f32 %v1792, %v1870
      %v1928 = vadd.f32 %v1793, %v1870
      %v1929 = vadd.f32 %v1794, %v1870
      %v1930 = vadd.f32 %v1795, %v1870
      %v1931 = vadd.f32 %v1796, %v1870
      %v1932 = vadd.f32 %v1797, %v1870
      %v1933 = vadd.f32 %v1798, %v1870
      %v1934 = vadd.f32 %v1799, %v1870
      %v1935 = vadd.f32 %v1800, %v1870
      %v1936 = vadd.f32 %v1801, %v1870
      %v1937 = vadd.f32 %v1802, %v1870
      %v1938 = vadd.f32 %v1803, %v1870
      %v1939 = vadd.f32 %v1804, %v1870
      %v1940 = vadd.f32 %v1805, %v1870
      %v1941 = vadd.f32 %v1806, %v1870
      %v1942 = vadd.f32 %v1807, %v1870
      %v1943 = vadd.f32 %v1808, %v1870
      %v1944 = vadd.f32 %v1809, %v1870
      %v1945 = vadd.f32 %v1810, %v1870
      %v1946 = vadd.f32 %v1811, %v1870
      %v1947 = vadd.f32 %v1812, %v1870
      %v1948 = vadd.f32 %v1813, %v1870
      %v1949 = vadd.f32 %v1814, %v1870
      %v1950 = vadd.f32 %v1815, %v1870
      %v1951 = vadd.f32 %v1816, %v1870
      %v1952 = vadd.f32 %v1817, %v1870
      %v1953 = vadd.f32 %v1818, %v1870
      %v1954 = vadd.f32 %v1819, %v1870
      %v1955 = vadd.f32 %v1820, %v1870
      %v1956 = vadd.f32 %v1821, %v1870
      %v1957 = vadd.f32 %v1822, %v1870
      %v1958 = vadd.f32 %v1823, %v1870
      %v1959 = vadd.f32 %v1824, %v1870
      %v1960 = vadd.f32 %v1825, %v1870
      %v1961 = vadd.f32 %v1826, %v1870
      %v1962 = vadd.f32 %v1827, %v1870
      %v1963 = vadd.f32 %v1828, %v1870
      %v1964 = vadd.f32 %v1829, %v1870
      %v1965 = vadd.f32 %v1830, %v1870
      %v1966 = vadd.f32 %v1831, %v1870
      %v1967 = vadd.f32 %v1832, %v1870
      %v1968 = vadd.f32 %v1833, %v1870
      %v1969 = vadd.f32 %v1834, %v1870
      %v1970 = vadd.f32 %v1835, %v1870
      %v1971 = vadd.f32 %v1836, %v1870
      %v1972 = vadd.f32 %v1837, %v1870
      %v1973 = vadd.f32 %v1838, %v1870
      %v1974 = vadd.f32 %v1839, %v1870
      %v1975 = vadd.f32 %v1840, %v1870
      %v1976 = vadd.f32 %v1841, %v1870
      %v1977 = vadd.f32 %v1842, %v1870
      %v1978 = vadd.f32 %v1843, %v1870
      %v1979 = vadd.f32 %v1844, %v1870
      %v1980 = vadd.f32 %v1845, %v1870
      %v1981 = vadd.f32 %v1846, %v1870
      %v1982 = vadd.f32 %v1847, %v1870
      %v1983 = vadd.f32 %v1848, %v1870
      %v1984 = vadd.f32 %v1849, %v1870
      %v1985 = vadd.f32 %v1850, %v1870
      %v1986 = vadd.f32 %v1851, %v1870
      %v1987 = vadd.f32 %v1852, %v1870
      %v1988 = vadd.f32 %v1853, %v1870
      %v1989 = vadd.f32 %v1854, %v1870
      %v1990 = vadd.f32 %v1855, %v1870
      %v1991 = vadd.f32 %v1856, %v1870
      %v1992 = vadd.f32 %v1857, %v1870
      %v1993 = vadd.f32 %v1858, %v1870
      %v1994 = vadd.f32 %v1859, %v1870
      %v1995 = vadd.f32 %v1860, %v1870
      %v1996 = vadd.f32 %v1861, %v1870
      %v1997 = vadd.f32 %v1862, %v1870
      %v1998 = vadd.f32 %v1863, %v1870
      %v1999 = vadd.f32 %v1864, %v1870
      %v2000 = vmax.f32 %v1872, 0.0
      %v2001 = vmax.f32 %v1873, 0.0
      %v2002 = vmax.f32 %v1874, 0.0
      %v2003 = vmax.f32 %v1875, 0.0
      %v2004 = vmax.f32 %v1876, 0.0
      %v2005 = vmax.f32 %v1877, 0.0
      %v2006 = vmax.f32 %v1878, 0.0
      %v2007 = vmax.f32 %v1879, 0.0
      %v2008 = vmax.f32 %v1880, 0.0
      %v2009 = vmax.f32 %v1881, 0.0
      %v2010 = vmax.f32 %v1882, 0.0
      %v2011 = vmax.f32 %v1883, 0.0
      %v2012 = vmax.f32 %v1884, 0.0
      %v2013 = vmax.f32 %v1885, 0.0
      %v2014 = vmax.f32 %v1886, 0.0
      %v2015 = vmax.f32 %v1887, 0.0
      %v2016 = vmax.f32 %v1888, 0.0
      %v2017 = vmax.f32 %v1889, 0.0
      %v2018 = vmax.f32 %v1890, 0.0
      %v2019 = vmax.f32 %v1891, 0.0
      %v2020 = vmax.f32 %v1892, 0.0
      %v2021 = vmax.f32 %v1893, 0.0
      %v2022 = vmax.f32 %v1894, 0.0
      %v2023 = vmax.f32 %v1895, 0.0
      %v2024 = vmax.f32 %v1896, 0.0
      %v2025 = vmax.f32 %v1897, 0.0
      %v2026 = vmax.f32 %v1898, 0.0
      %v2027 = vmax.f32 %v1899, 0.0
      %v2028 = vmax.f32 %v1900, 0.0
      %v2029 = vmax.f32 %v1901, 0.0
      %v2030 = vmax.f32 %v1902, 0.0
      %v2031 = vmax.f32 %v1903, 0.0
      %v2032 = vmax.f32 %v1904, 0.0
      %v2033 = vmax.f32 %v1905, 0.0
      %v2034 = vmax.f32 %v1906, 0.0
      %v2035 = vmax.f32 %v1907, 0.0
      %v2036 = vmax.f32 %v1908, 0.0
      %v2037 = vmax.f32 %v1909, 0.0
      %v2038 = vmax.f32 %v1910, 0.0
      %v2039 = vmax.f32 %v1911, 0.0
      %v2040 = vmax.f32 %v1912, 0.0
      %v2041 = vmax.f32 %v1913, 0.0
      %v2042 = vmax.f32 %v1914, 0.0
      %v2043 = vmax.f32 %v1915, 0.0
      %v2044 = vmax.f32 %v1916, 0.0
      %v2045 = vmax.f32 %v1917, 0.0
      %v2046 = vmax.f32 %v1918, 0.0
      %v2047 = vmax.f32 %v1919, 0.0
      %v2048 = vmax.f32 %v1920, 0.0
      %v2049 = vmax.f32 %v1921, 0.0
      %v2050 = vmax.f32 %v1922, 0.0
      %v2051 = vmax.f32 %v1923, 0.0
      %v2052 = vmax.f32 %v1924, 0.0
      %v2053 = vmax.f32 %v1925, 0.0
      %v2054 = vmax.f32 %v1926, 0.0
      %v2055 = vmax.f32 %v1927, 0.0
      %v2056 = vmax.f32 %v1928, 0.0
      %v2057 = vmax.f32 %v1929, 0.0
      %v2058 = vmax.f32 %v1930, 0.0
      %v2059 = vmax.f32 %v1931, 0.0
      %v2060 = vmax.f32 %v1932, 0.0
      %v2061 = vmax.f32 %v1933, 0.0
      %v2062 = vmax.f32 %v1934, 0.0
      %v2063 = vmax.f32 %v1935, 0.0
      %v2064 = vmax.f32 %v1936, 0.0
      %v2065 = vmax.f32 %v1937, 0.0
      %v2066 = vmax.f32 %v1938, 0.0
      %v2067 = vmax.f32 %v1939, 0.0
      %v2068 = vmax.f32 %v1940, 0.0
      %v2069 = vmax.f32 %v1941, 0.0
      %v2070 = vmax.f32 %v1942, 0.0
      %v2071 = vmax.f32 %v1943, 0.0
      %v2072 = vmax.f32 %v1944, 0.0
      %v2073 = vmax.f32 %v1945, 0.0
      %v2074 = vmax.f32 %v1946, 0.0
      %v2075 = vmax.f32 %v1947, 0.0
      %v2076 = vmax.f32 %v1948, 0.0
      %v2077 = vmax.f32 %v1949, 0.0
      %v2078 = vmax.f32 %v1950, 0.0
      %v2079 = vmax.f32 %v1951, 0.0
      %v2080 = vmax.f32 %v1952, 0.0
      %v2081 = vmax.f32 %v1953, 0.0
      %v2082 = vmax.f32 %v1954, 0.0
      %v2083 = vmax.f32 %v1955, 0.0
      %v2084 = vmax.f32 %v1956, 0.0
      %v2085 = vmax.f32 %v1957, 0.0
      %v2086 = vmax.f32 %v1958, 0.0
      %v2087 = vmax.f32 %v1959, 0.0
      %v2088 = vmax.f32 %v1960, 0.0
      %v2089 = vmax.f32 %v1961, 0.0
      %v2090 = vmax.f32 %v1962, 0.0
      %v2091 = vmax.f32 %v1963, 0.0
      %v2092 = vmax.f32 %v1964, 0.0
      %v2093 = vmax.f32 %v1965, 0.0
      %v2094 = vmax.f32 %v1966, 0.0
      %v2095 = vmax.f32 %v1967, 0.0
      %v2096 = vmax.f32 %v1968, 0.0
      %v2097 = vmax.f32 %v1969, 0.0
      %v2098 = vmax.f32 %v1970, 0.0
      %v2099 = vmax.f32 %v1971, 0.0
      %v2100 = vmax.f32 %v1972, 0.0
      %v2101 = vmax.f32 %v1973, 0.0
      %v2102 = vmax.f32 %v1974, 0.0
      %v2103 = vmax.f32 %v1975, 0.0
      %v2104 = vmax.f32 %v1976, 0.0
      %v2105 = vmax.f32 %v1977, 0.0
      %v2106 = vmax.f32 %v1978, 0.0
      %v2107 = vmax.f32 %v1979, 0.0
      %v2108 = vmax.f32 %v1980, 0.0
      %v2109 = vmax.f32 %v1981, 0.0
      %v2110 = vmax.f32 %v1982, 0.0
      %v2111 = vmax.f32 %v1983, 0.0
      %v2112 = vmax.f32 %v1984, 0.0
      %v2113 = vmax.f32 %v1985, 0.0
      %v2114 = vmax.f32 %v1986, 0.0
      %v2115 = vmax.f32 %v1987, 0.0
      %v2116 = vmax.f32 %v1988, 0.0
      %v2117 = vmax.f32 %v1989, 0.0
      %v2118 = vmax.f32 %v1990, 0.0
      %v2119 = vmax.f32 %v1991, 0.0
      %v2120 = vmax.f32 %v1992, 0.0
      %v2121 = vmax.f32 %v1993, 0.0
      %v2122 = vmax.f32 %v1994, 0.0
      %v2123 = vmax.f32 %v1995, 0.0
      %v2124 = vmax.f32 %v1996, 0.0
      %v2125 = vmax.f32 %v1997, 0.0
      %v2126 = vmax.f32 %v1998, 0.0
      %v2127 = vmax.f32 %v1999, 0.0
      %v2128 = vpack.c.bf16 %v2001, %v2000
      %v2129 = vpack.c.bf16 %v2003, %v2002
      %v2130 = vpack.c.bf16 %v2005, %v2004
      %v2131 = vpack.c.bf16 %v2007, %v2006
      %v2132 = vpack.c.bf16 %v2009, %v2008
      %v2133 = vpack.c.bf16 %v2011, %v2010
      %v2134 = vpack.c.bf16 %v2013, %v2012
      %v2135 = vpack.c.bf16 %v2015, %v2014
      %v2136 = vpack.c.bf16 %v2017, %v2016
      %v2137 = vpack.c.bf16 %v2019, %v2018
      %v2138 = vpack.c.bf16 %v2021, %v2020
      %v2139 = vpack.c.bf16 %v2023, %v2022
      %v2140 = vpack.c.bf16 %v2025, %v2024
      %v2141 = vpack.c.bf16 %v2027, %v2026
      %v2142 = vpack.c.bf16 %v2029, %v2028
      %v2143 = vpack.c.bf16 %v2031, %v2030
      %v2144 = vpack.c.bf16 %v2033, %v2032
      %v2145 = vpack.c.bf16 %v2035, %v2034
      %v2146 = vpack.c.bf16 %v2037, %v2036
      %v2147 = vpack.c.bf16 %v2039, %v2038
      %v2148 = vpack.c.bf16 %v2041, %v2040
      %v2149 = vpack.c.bf16 %v2043, %v2042
      %v2150 = vpack.c.bf16 %v2045, %v2044
      %v2151 = vpack.c.bf16 %v2047, %v2046
      %v2152 = vpack.c.bf16 %v2049, %v2048
      %v2153 = vpack.c.bf16 %v2051, %v2050
      %v2154 = vpack.c.bf16 %v2053, %v2052
      %v2155 = vpack.c.bf16 %v2055, %v2054
      %v2156 = vpack.c.bf16 %v2057, %v2056
      %v2157 = vpack.c.bf16 %v2059, %v2058
      %v2158 = vpack.c.bf16 %v2061, %v2060
      %v2159 = vpack.c.bf16 %v2063, %v2062
      %v2160 = vpack.c.bf16 %v2065, %v2064
      %v2161 = vpack.c.bf16 %v2067, %v2066
      %v2162 = vpack.c.bf16 %v2069, %v2068
      %v2163 = vpack.c.bf16 %v2071, %v2070
      %v2164 = vpack.c.bf16 %v2073, %v2072
      %v2165 = vpack.c.bf16 %v2075, %v2074
      %v2166 = vpack.c.bf16 %v2077, %v2076
      %v2167 = vpack.c.bf16 %v2079, %v2078
      %v2168 = vpack.c.bf16 %v2081, %v2080
      %v2169 = vpack.c.bf16 %v2083, %v2082
      %v2170 = vpack.c.bf16 %v2085, %v2084
      %v2171 = vpack.c.bf16 %v2087, %v2086
      %v2172 = vpack.c.bf16 %v2089, %v2088
      %v2173 = vpack.c.bf16 %v2091, %v2090
      %v2174 = vpack.c.bf16 %v2093, %v2092
      %v2175 = vpack.c.bf16 %v2095, %v2094
      %v2176 = vpack.c.bf16 %v2097, %v2096
      %v2177 = vpack.c.bf16 %v2099, %v2098
      %v2178 = vpack.c.bf16 %v2101, %v2100
      %v2179 = vpack.c.bf16 %v2103, %v2102
      %v2180 = vpack.c.bf16 %v2105, %v2104
      %v2181 = vpack.c.bf16 %v2107, %v2106
      %v2182 = vpack.c.bf16 %v2109, %v2108
      %v2183 = vpack.c.bf16 %v2111, %v2110
      %v2184 = vpack.c.bf16 %v2113, %v2112
      %v2185 = vpack.c.bf16 %v2115, %v2114
      %v2186 = vpack.c.bf16 %v2117, %v2116
      %v2187 = vpack.c.bf16 %v2119, %v2118
      %v2188 = vpack.c.bf16 %v2121, %v2120
      %v2189 = vpack.c.bf16 %v2123, %v2122
      %v2190 = vpack.c.bf16 %v2125, %v2124
      %v2191 = vpack.c.bf16 %v2127, %v2126
      %v2256 = vunpack.c.l.b16 %v2128
      %v2257 = vunpack.c.h.b16 %v2128
      %v2258 = vunpack.c.l.b16 %v2129
      %v2259 = vunpack.c.h.b16 %v2129
      %v2260 = vunpack.c.l.b16 %v2130
      %v2261 = vunpack.c.h.b16 %v2130
      %v2262 = vunpack.c.l.b16 %v2131
      %v2263 = vunpack.c.h.b16 %v2131
      %v2264 = vunpack.c.l.b16 %v2132
      %v2265 = vunpack.c.h.b16 %v2132
      %v2266 = vunpack.c.l.b16 %v2133
      %v2267 = vunpack.c.h.b16 %v2133
      %v2268 = vunpack.c.l.b16 %v2134
      %v2269 = vunpack.c.h.b16 %v2134
      %v2270 = vunpack.c.l.b16 %v2135
      %v2271 = vunpack.c.h.b16 %v2135
      %v2272 = vunpack.c.l.b16 %v2136
      %v2273 = vunpack.c.h.b16 %v2136
      %v2274 = vunpack.c.l.b16 %v2137
      %v2275 = vunpack.c.h.b16 %v2137
      %v2276 = vunpack.c.l.b16 %v2138
      %v2277 = vunpack.c.h.b16 %v2138
      %v2278 = vunpack.c.l.b16 %v2139
      %v2279 = vunpack.c.h.b16 %v2139
      %v2280 = vunpack.c.l.b16 %v2140
      %v2281 = vunpack.c.h.b16 %v2140
      %v2282 = vunpack.c.l.b16 %v2141
      %v2283 = vunpack.c.h.b16 %v2141
      %v2284 = vunpack.c.l.b16 %v2142
      %v2285 = vunpack.c.h.b16 %v2142
      %v2286 = vunpack.c.l.b16 %v2143
      %v2287 = vunpack.c.h.b16 %v2143
      %v2288 = vunpack.c.l.b16 %v2144
      %v2289 = vunpack.c.h.b16 %v2144
      %v2290 = vunpack.c.l.b16 %v2145
      %v2291 = vunpack.c.h.b16 %v2145
      %v2292 = vunpack.c.l.b16 %v2146
      %v2293 = vunpack.c.h.b16 %v2146
      %v2294 = vunpack.c.l.b16 %v2147
      %v2295 = vunpack.c.h.b16 %v2147
      %v2296 = vunpack.c.l.b16 %v2148
      %v2297 = vunpack.c.h.b16 %v2148
      %v2298 = vunpack.c.l.b16 %v2149
      %v2299 = vunpack.c.h.b16 %v2149
      %v2300 = vunpack.c.l.b16 %v2150
      %v2301 = vunpack.c.h.b16 %v2150
      %v2302 = vunpack.c.l.b16 %v2151
      %v2303 = vunpack.c.h.b16 %v2151
      %v2304 = vunpack.c.l.b16 %v2152
      %v2305 = vunpack.c.h.b16 %v2152
      %v2306 = vunpack.c.l.b16 %v2153
      %v2307 = vunpack.c.h.b16 %v2153
      %v2308 = vunpack.c.l.b16 %v2154
      %v2309 = vunpack.c.h.b16 %v2154
      %v2310 = vunpack.c.l.b16 %v2155
      %v2311 = vunpack.c.h.b16 %v2155
      %v2312 = vunpack.c.l.b16 %v2156
      %v2313 = vunpack.c.h.b16 %v2156
      %v2314 = vunpack.c.l.b16 %v2157
      %v2315 = vunpack.c.h.b16 %v2157
      %v2316 = vunpack.c.l.b16 %v2158
      %v2317 = vunpack.c.h.b16 %v2158
      %v2318 = vunpack.c.l.b16 %v2159
      %v2319 = vunpack.c.h.b16 %v2159
      %v2320 = vunpack.c.l.b16 %v2160
      %v2321 = vunpack.c.h.b16 %v2160
      %v2322 = vunpack.c.l.b16 %v2161
      %v2323 = vunpack.c.h.b16 %v2161
      %v2324 = vunpack.c.l.b16 %v2162
      %v2325 = vunpack.c.h.b16 %v2162
      %v2326 = vunpack.c.l.b16 %v2163
      %v2327 = vunpack.c.h.b16 %v2163
      %v2328 = vunpack.c.l.b16 %v2164
      %v2329 = vunpack.c.h.b16 %v2164
      %v2330 = vunpack.c.l.b16 %v2165
      %v2331 = vunpack.c.h.b16 %v2165
      %v2332 = vunpack.c.l.b16 %v2166
      %v2333 = vunpack.c.h.b16 %v2166
      %v2334 = vunpack.c.l.b16 %v2167
      %v2335 = vunpack.c.h.b16 %v2167
      %v2336 = vunpack.c.l.b16 %v2168
      %v2337 = vunpack.c.h.b16 %v2168
      %v2338 = vunpack.c.l.b16 %v2169
      %v2339 = vunpack.c.h.b16 %v2169
      %v2340 = vunpack.c.l.b16 %v2170
      %v2341 = vunpack.c.h.b16 %v2170
      %v2342 = vunpack.c.l.b16 %v2171
      %v2343 = vunpack.c.h.b16 %v2171
      %v2344 = vunpack.c.l.b16 %v2172
      %v2345 = vunpack.c.h.b16 %v2172
      %v2346 = vunpack.c.l.b16 %v2173
      %v2347 = vunpack.c.h.b16 %v2173
      %v2348 = vunpack.c.l.b16 %v2174
      %v2349 = vunpack.c.h.b16 %v2174
      %v2350 = vunpack.c.l.b16 %v2175
      %v2351 = vunpack.c.h.b16 %v2175
      %v2352 = vunpack.c.l.b16 %v2176
      %v2353 = vunpack.c.h.b16 %v2176
      %v2354 = vunpack.c.l.b16 %v2177
      %v2355 = vunpack.c.h.b16 %v2177
      %v2356 = vunpack.c.l.b16 %v2178
      %v2357 = vunpack.c.h.b16 %v2178
      %v2358 = vunpack.c.l.b16 %v2179
      %v2359 = vunpack.c.h.b16 %v2179
      %v2360 = vunpack.c.l.b16 %v2180
      %v2361 = vunpack.c.h.b16 %v2180
      %v2362 = vunpack.c.l.b16 %v2181
      %v2363 = vunpack.c.h.b16 %v2181
      %v2364 = vunpack.c.l.b16 %v2182
      %v2365 = vunpack.c.h.b16 %v2182
      %v2366 = vunpack.c.l.b16 %v2183
      %v2367 = vunpack.c.h.b16 %v2183
      %v2368 = vunpack.c.l.b16 %v2184
      %v2369 = vunpack.c.h.b16 %v2184
      %v2370 = vunpack.c.l.b16 %v2185
      %v2371 = vunpack.c.h.b16 %v2185
      %v2372 = vunpack.c.l.b16 %v2186
      %v2373 = vunpack.c.h.b16 %v2186
      %v2374 = vunpack.c.l.b16 %v2187
      %v2375 = vunpack.c.h.b16 %v2187
      %v2376 = vunpack.c.l.b16 %v2188
      %v2377 = vunpack.c.h.b16 %v2188
      %v2378 = vunpack.c.l.b16 %v2189
      %v2379 = vunpack.c.h.b16 %v2189
      %v2380 = vunpack.c.l.b16 %v2190
      %v2381 = vunpack.c.h.b16 %v2190
      %v2382 = vunpack.c.l.b16 %v2191
      %v2383 = vunpack.c.h.b16 %v2191
      %v2384 = vpack.c.b16 %v2256, %v2256
      %v2385 = vpack.c.b16 %v2257, %v2257
      %v2386 = vpack.c.b16 %v2258, %v2258
      %v2387 = vpack.c.b16 %v2259, %v2259
      %v2388 = vpack.c.b16 %v2260, %v2260
      %v2389 = vpack.c.b16 %v2261, %v2261
      %v2390 = vpack.c.b16 %v2262, %v2262
      %v2391 = vpack.c.b16 %v2263, %v2263
      %v2392 = vpack.c.b16 %v2264, %v2264
      %v2393 = vpack.c.b16 %v2265, %v2265
      %v2394 = vpack.c.b16 %v2266, %v2266
      %v2395 = vpack.c.b16 %v2267, %v2267
      %v2396 = vpack.c.b16 %v2268, %v2268
      %v2397 = vpack.c.b16 %v2269, %v2269
      %v2398 = vpack.c.b16 %v2270, %v2270
      %v2399 = vpack.c.b16 %v2271, %v2271
      %v2400 = vpack.c.b16 %v2272, %v2272
      %v2401 = vpack.c.b16 %v2273, %v2273
      %v2402 = vpack.c.b16 %v2274, %v2274
      %v2403 = vpack.c.b16 %v2275, %v2275
      %v2404 = vpack.c.b16 %v2276, %v2276
      %v2405 = vpack.c.b16 %v2277, %v2277
      %v2406 = vpack.c.b16 %v2278, %v2278
      %v2407 = vpack.c.b16 %v2279, %v2279
      %v2408 = vpack.c.b16 %v2280, %v2280
      %v2409 = vpack.c.b16 %v2281, %v2281
      %v2410 = vpack.c.b16 %v2282, %v2282
      %v2411 = vpack.c.b16 %v2283, %v2283
      %v2412 = vpack.c.b16 %v2284, %v2284
      %v2413 = vpack.c.b16 %v2285, %v2285
      %v2414 = vpack.c.b16 %v2286, %v2286
      %v2415 = vpack.c.b16 %v2287, %v2287
      %v2416 = vpack.c.b16 %v2288, %v2288
      %v2417 = vpack.c.b16 %v2289, %v2289
      %v2418 = vpack.c.b16 %v2290, %v2290
      %v2419 = vpack.c.b16 %v2291, %v2291
      %v2420 = vpack.c.b16 %v2292, %v2292
      %v2421 = vpack.c.b16 %v2293, %v2293
      %v2422 = vpack.c.b16 %v2294, %v2294
      %v2423 = vpack.c.b16 %v2295, %v2295
      %v2424 = vpack.c.b16 %v2296, %v2296
      %v2425 = vpack.c.b16 %v2297, %v2297
      %v2426 = vpack.c.b16 %v2298, %v2298
      %v2427 = vpack.c.b16 %v2299, %v2299
      %v2428 = vpack.c.b16 %v2300, %v2300
      %v2429 = vpack.c.b16 %v2301, %v2301
      %v2430 = vpack.c.b16 %v2302, %v2302
      %v2431 = vpack.c.b16 %v2303, %v2303
      %v2432 = vpack.c.b16 %v2304, %v2304
      %v2433 = vpack.c.b16 %v2305, %v2305
      %v2434 = vpack.c.b16 %v2306, %v2306
      %v2435 = vpack.c.b16 %v2307, %v2307
      %v2436 = vpack.c.b16 %v2308, %v2308
      %v2437 = vpack.c.b16 %v2309, %v2309
      %v2438 = vpack.c.b16 %v2310, %v2310
      %v2439 = vpack.c.b16 %v2311, %v2311
      %v2440 = vpack.c.b16 %v2312, %v2312
      %v2441 = vpack.c.b16 %v2313, %v2313
      %v2442 = vpack.c.b16 %v2314, %v2314
      %v2443 = vpack.c.b16 %v2315, %v2315
      %v2444 = vpack.c.b16 %v2316, %v2316
      %v2445 = vpack.c.b16 %v2317, %v2317
      %v2446 = vpack.c.b16 %v2318, %v2318
      %v2447 = vpack.c.b16 %v2319, %v2319
      %v2448 = vpack.c.b16 %v2320, %v2320
      %v2449 = vpack.c.b16 %v2321, %v2321
      %v2450 = vpack.c.b16 %v2322, %v2322
      %v2451 = vpack.c.b16 %v2323, %v2323
      %v2452 = vpack.c.b16 %v2324, %v2324
      %v2453 = vpack.c.b16 %v2325, %v2325
      %v2454 = vpack.c.b16 %v2326, %v2326
      %v2455 = vpack.c.b16 %v2327, %v2327
      %v2456 = vpack.c.b16 %v2328, %v2328
      %v2457 = vpack.c.b16 %v2329, %v2329
      %v2458 = vpack.c.b16 %v2330, %v2330
      %v2459 = vpack.c.b16 %v2331, %v2331
      %v2460 = vpack.c.b16 %v2332, %v2332
      %v2461 = vpack.c.b16 %v2333, %v2333
      %v2462 = vpack.c.b16 %v2334, %v2334
      %v2463 = vpack.c.b16 %v2335, %v2335
      %v2464 = vpack.c.b16 %v2336, %v2336
      %v2465 = vpack.c.b16 %v2337, %v2337
      %v2466 = vpack.c.b16 %v2338, %v2338
      %v2467 = vpack.c.b16 %v2339, %v2339
      %v2468 = vpack.c.b16 %v2340, %v2340
      %v2469 = vpack.c.b16 %v2341, %v2341
      %v2470 = vpack.c.b16 %v2342, %v2342
      %v2471 = vpack.c.b16 %v2343, %v2343
      %v2472 = vpack.c.b16 %v2344, %v2344
      %v2473 = vpack.c.b16 %v2345, %v2345
      %v2474 = vpack.c.b16 %v2346, %v2346
      %v2475 = vpack.c.b16 %v2347, %v2347
      %v2476 = vpack.c.b16 %v2348, %v2348
      %v2477 = vpack.c.b16 %v2349, %v2349
      %v2478 = vpack.c.b16 %v2350, %v2350
      %v2479 = vpack.c.b16 %v2351, %v2351
      %v2480 = vpack.c.b16 %v2352, %v2352
      %v2481 = vpack.c.b16 %v2353, %v2353
      %v2482 = vpack.c.b16 %v2354, %v2354
      %v2483 = vpack.c.b16 %v2355, %v2355
      %v2484 = vpack.c.b16 %v2356, %v2356
      %v2485 = vpack.c.b16 %v2357, %v2357
      %v2486 = vpack.c.b16 %v2358, %v2358
      %v2487 = vpack.c.b16 %v2359, %v2359
      %v2488 = vpack.c.b16 %v2360, %v2360
      %v2489 = vpack.c.b16 %v2361, %v2361
      %v2490 = vpack.c.b16 %v2362, %v2362
      %v2491 = vpack.c.b16 %v2363, %v2363
      %v2492 = vpack.c.b16 %v2364, %v2364
      %v2493 = vpack.c.b16 %v2365, %v2365
      %v2494 = vpack.c.b16 %v2366, %v2366
      %v2495 = vpack.c.b16 %v2367, %v2367
      %v2496 = vpack.c.b16 %v2368, %v2368
      %v2497 = vpack.c.b16 %v2369, %v2369
      %v2498 = vpack.c.b16 %v2370, %v2370
      %v2499 = vpack.c.b16 %v2371, %v2371
      %v2500 = vpack.c.b16 %v2372, %v2372
      %v2501 = vpack.c.b16 %v2373, %v2373
      %v2502 = vpack.c.b16 %v2374, %v2374
      %v2503 = vpack.c.b16 %v2375, %v2375
      %v2504 = vpack.c.b16 %v2376, %v2376
      %v2505 = vpack.c.b16 %v2377, %v2377
      %v2506 = vpack.c.b16 %v2378, %v2378
      %v2507 = vpack.c.b16 %v2379, %v2379
      %v2508 = vpack.c.b16 %v2380, %v2380
      %v2509 = vpack.c.b16 %v2381, %v2381
      %v2510 = vpack.c.b16 %v2382, %v2382
      %v2511 = vpack.c.b16 %v2383, %v2383
      %vm2640 = vcmask 125952
      %2641 = vst.msk [vmem:[%s202] sm:$0xf] %vm2640, %v2384
      %2642 = vst.msk [vmem:[%s202 + $0x4] sm:$0xf] %vm2640, %v2385
      %2643 = vst.msk [vmem:[%s202 + $0x8] sm:$0xf] %vm2640, %v2386
      %2644 = vst.msk [vmem:[%s202 + $0xc] sm:$0xf] %vm2640, %v2387
      %2645 = vst.msk [vmem:[%s202 + $0x10] sm:$0xf] %vm2640, %v2388
      %2646 = vst.msk [vmem:[%s202 + $0x14] sm:$0xf] %vm2640, %v2389
      %2647 = vst.msk [vmem:[%s202 + $0x18] sm:$0xf] %vm2640, %v2390
      %2648 = vst.msk [vmem:[%s202 + $0x1c] sm:$0xf] %vm2640, %v2391
      %2649 = vst.msk [vmem:[%s202 + $0x20] sm:$0xf] %vm2640, %v2392
      %2650 = vst.msk [vmem:[%s202 + $0x24] sm:$0xf] %vm2640, %v2393
      %2651 = vst.msk [vmem:[%s202 + $0x28] sm:$0xf] %vm2640, %v2394
      %2652 = vst.msk [vmem:[%s202 + $0x2c] sm:$0xf] %vm2640, %v2395
      %2653 = vst.msk [vmem:[%s202 + $0x30] sm:$0xf] %vm2640, %v2396
      %2654 = vst.msk [vmem:[%s202 + $0x34] sm:$0xf] %vm2640, %v2397
      %2655 = vst.msk [vmem:[%s202 + $0x38] sm:$0xf] %vm2640, %v2398
      %2656 = vst.msk [vmem:[%s202 + $0x3c] sm:$0xf] %vm2640, %v2399
      %2657 = vst.msk [vmem:[%s202 + $0x40] sm:$0xf] %vm2640, %v2400
      %2658 = vst.msk [vmem:[%s202 + $0x44] sm:$0xf] %vm2640, %v2401
      %2659 = vst.msk [vmem:[%s202 + $0x48] sm:$0xf] %vm2640, %v2402
      %2660 = vst.msk [vmem:[%s202 + $0x4c] sm:$0xf] %vm2640, %v2403
      %2661 = vst.msk [vmem:[%s202 + $0x50] sm:$0xf] %vm2640, %v2404
      %2662 = vst.msk [vmem:[%s202 + $0x54] sm:$0xf] %vm2640, %v2405
      %2663 = vst.msk [vmem:[%s202 + $0x58] sm:$0xf] %vm2640, %v2406
      %2664 = vst.msk [vmem:[%s202 + $0x5c] sm:$0xf] %vm2640, %v2407
      %2665 = vst.msk [vmem:[%s202 + $0x60] sm:$0xf] %vm2640, %v2408
      %2666 = vst.msk [vmem:[%s202 + $0x64] sm:$0xf] %vm2640, %v2409
      %2667 = vst.msk [vmem:[%s202 + $0x68] sm:$0xf] %vm2640, %v2410
      %2668 = vst.msk [vmem:[%s202 + $0x6c] sm:$0xf] %vm2640, %v2411
      %2669 = vst.msk [vmem:[%s202 + $0x70] sm:$0xf] %vm2640, %v2412
      %2670 = vst.msk [vmem:[%s202 + $0x74] sm:$0xf] %vm2640, %v2413
      %2671 = vst.msk [vmem:[%s202 + $0x78] sm:$0xf] %vm2640, %v2414
      %2672 = vst.msk [vmem:[%s202 + $0x7c] sm:$0xf] %vm2640, %v2415
      %2673 = vst.msk [vmem:[%s202 + $0x80] sm:$0xf] %vm2640, %v2416
      %2674 = vst.msk [vmem:[%s202 + $0x84] sm:$0xf] %vm2640, %v2417
      %2675 = vst.msk [vmem:[%s202 + $0x88] sm:$0xf] %vm2640, %v2418
      %2676 = vst.msk [vmem:[%s202 + $0x8c] sm:$0xf] %vm2640, %v2419
      %2677 = vst.msk [vmem:[%s202 + $0x90] sm:$0xf] %vm2640, %v2420
      %2678 = vst.msk [vmem:[%s202 + $0x94] sm:$0xf] %vm2640, %v2421
      %2679 = vst.msk [vmem:[%s202 + $0x98] sm:$0xf] %vm2640, %v2422
      %2680 = vst.msk [vmem:[%s202 + $0x9c] sm:$0xf] %vm2640, %v2423
      %2681 = vst.msk [vmem:[%s202 + $0xa0] sm:$0xf] %vm2640, %v2424
      %2682 = vst.msk [vmem:[%s202 + $0xa4] sm:$0xf] %vm2640, %v2425
      %2683 = vst.msk [vmem:[%s202 + $0xa8] sm:$0xf] %vm2640, %v2426
      %2684 = vst.msk [vmem:[%s202 + $0xac] sm:$0xf] %vm2640, %v2427
      %2685 = vst.msk [vmem:[%s202 + $0xb0] sm:$0xf] %vm2640, %v2428
      %2686 = vst.msk [vmem:[%s202 + $0xb4] sm:$0xf] %vm2640, %v2429
      %2687 = vst.msk [vmem:[%s202 + $0xb8] sm:$0xf] %vm2640, %v2430
      %2688 = vst.msk [vmem:[%s202 + $0xbc] sm:$0xf] %vm2640, %v2431
      %2689 = vst.msk [vmem:[%s202 + $0xc0] sm:$0xf] %vm2640, %v2432
      %2690 = vst.msk [vmem:[%s202 + $0xc4] sm:$0xf] %vm2640, %v2433
      %2691 = vst.msk [vmem:[%s202 + $0xc8] sm:$0xf] %vm2640, %v2434
      %2692 = vst.msk [vmem:[%s202 + $0xcc] sm:$0xf] %vm2640, %v2435
      %2693 = vst.msk [vmem:[%s202 + $0xd0] sm:$0xf] %vm2640, %v2436
      %2694 = vst.msk [vmem:[%s202 + $0xd4] sm:$0xf] %vm2640, %v2437
      %2695 = vst.msk [vmem:[%s202 + $0xd8] sm:$0xf] %vm2640, %v2438
      %2696 = vst.msk [vmem:[%s202 + $0xdc] sm:$0xf] %vm2640, %v2439
      %2697 = vst.msk [vmem:[%s202 + $0xe0] sm:$0xf] %vm2640, %v2440
      %2698 = vst.msk [vmem:[%s202 + $0xe4] sm:$0xf] %vm2640, %v2441
      %2699 = vst.msk [vmem:[%s202 + $0xe8] sm:$0xf] %vm2640, %v2442
      %2700 = vst.msk [vmem:[%s202 + $0xec] sm:$0xf] %vm2640, %v2443
      %2701 = vst.msk [vmem:[%s202 + $0xf0] sm:$0xf] %vm2640, %v2444
      %2702 = vst.msk [vmem:[%s202 + $0xf4] sm:$0xf] %vm2640, %v2445
      %2703 = vst.msk [vmem:[%s202 + $0xf8] sm:$0xf] %vm2640, %v2446
      %2704 = vst.msk [vmem:[%s202 + $0xfc] sm:$0xf] %vm2640, %v2447
      %2705 = vst.msk [vmem:[%s202 + $0x100] sm:$0xf] %vm2640, %v2448
      %2706 = vst.msk [vmem:[%s202 + $0x104] sm:$0xf] %vm2640, %v2449
      %2707 = vst.msk [vmem:[%s202 + $0x108] sm:$0xf] %vm2640, %v2450
      %2708 = vst.msk [vmem:[%s202 + $0x10c] sm:$0xf] %vm2640, %v2451
      %2709 = vst.msk [vmem:[%s202 + $0x110] sm:$0xf] %vm2640, %v2452
      %2710 = vst.msk [vmem:[%s202 + $0x114] sm:$0xf] %vm2640, %v2453
      %2711 = vst.msk [vmem:[%s202 + $0x118] sm:$0xf] %vm2640, %v2454
      %2712 = vst.msk [vmem:[%s202 + $0x11c] sm:$0xf] %vm2640, %v2455
      %2713 = vst.msk [vmem:[%s202 + $0x120] sm:$0xf] %vm2640, %v2456
      %2714 = vst.msk [vmem:[%s202 + $0x124] sm:$0xf] %vm2640, %v2457
      %2715 = vst.msk [vmem:[%s202 + $0x128] sm:$0xf] %vm2640, %v2458
      %2716 = vst.msk [vmem:[%s202 + $0x12c] sm:$0xf] %vm2640, %v2459
      %2717 = vst.msk [vmem:[%s202 + $0x130] sm:$0xf] %vm2640, %v2460
      %2718 = vst.msk [vmem:[%s202 + $0x134] sm:$0xf] %vm2640, %v2461
      %2719 = vst.msk [vmem:[%s202 + $0x138] sm:$0xf] %vm2640, %v2462
      %2720 = vst.msk [vmem:[%s202 + $0x13c] sm:$0xf] %vm2640, %v2463
      %2721 = vst.msk [vmem:[%s202 + $0x140] sm:$0xf] %vm2640, %v2464
      %2722 = vst.msk [vmem:[%s202 + $0x144] sm:$0xf] %vm2640, %v2465
      %2723 = vst.msk [vmem:[%s202 + $0x148] sm:$0xf] %vm2640, %v2466
      %2724 = vst.msk [vmem:[%s202 + $0x14c] sm:$0xf] %vm2640, %v2467
      %2725 = vst.msk [vmem:[%s202 + $0x150] sm:$0xf] %vm2640, %v2468
      %2726 = vst.msk [vmem:[%s202 + $0x154] sm:$0xf] %vm2640, %v2469
      %2727 = vst.msk [vmem:[%s202 + $0x158] sm:$0xf] %vm2640, %v2470
      %2728 = vst.msk [vmem:[%s202 + $0x15c] sm:$0xf] %vm2640, %v2471
      %2729 = vst.msk [vmem:[%s202 + $0x160] sm:$0xf] %vm2640, %v2472
      %2730 = vst.msk [vmem:[%s202 + $0x164] sm:$0xf] %vm2640, %v2473
      %2731 = vst.msk [vmem:[%s202 + $0x168] sm:$0xf] %vm2640, %v2474
      %2732 = vst.msk [vmem:[%s202 + $0x16c] sm:$0xf] %vm2640, %v2475
      %2733 = vst.msk [vmem:[%s202 + $0x170] sm:$0xf] %vm2640, %v2476
      %2734 = vst.msk [vmem:[%s202 + $0x174] sm:$0xf] %vm2640, %v2477
      %2735 = vst.msk [vmem:[%s202 + $0x178] sm:$0xf] %vm2640, %v2478
      %2736 = vst.msk [vmem:[%s202 + $0x17c] sm:$0xf] %vm2640, %v2479
      %2737 = vst.msk [vmem:[%s202 + $0x180] sm:$0xf] %vm2640, %v2480
      %2738 = vst.msk [vmem:[%s202 + $0x184] sm:$0xf] %vm2640, %v2481
      %2739 = vst.msk [vmem:[%s202 + $0x188] sm:$0xf] %vm2640, %v2482
      %2740 = vst.msk [vmem:[%s202 + $0x18c] sm:$0xf] %vm2640, %v2483
      %2741 = vst.msk [vmem:[%s202 + $0x190] sm:$0xf] %vm2640, %v2484
      %2742 = vst.msk [vmem:[%s202 + $0x194] sm:$0xf] %vm2640, %v2485
      %2743 = vst.msk [vmem:[%s202 + $0x198] sm:$0xf] %vm2640, %v2486
      %2744 = vst.msk [vmem:[%s202 + $0x19c] sm:$0xf] %vm2640, %v2487
      %2745 = vst.msk [vmem:[%s202 + $0x1a0] sm:$0xf] %vm2640, %v2488
      %2746 = vst.msk [vmem:[%s202 + $0x1a4] sm:$0xf] %vm2640, %v2489
      %2747 = vst.msk [vmem:[%s202 + $0x1a8] sm:$0xf] %vm2640, %v2490
      %2748 = vst.msk [vmem:[%s202 + $0x1ac] sm:$0xf] %vm2640, %v2491
      %2749 = vst.msk [vmem:[%s202 + $0x1b0] sm:$0xf] %vm2640, %v2492
      %2750 = vst.msk [vmem:[%s202 + $0x1b4] sm:$0xf] %vm2640, %v2493
      %2751 = vst.msk [vmem:[%s202 + $0x1b8] sm:$0xf] %vm2640, %v2494
      %2752 = vst.msk [vmem:[%s202 + $0x1bc] sm:$0xf] %vm2640, %v2495
      %2753 = vst.msk [vmem:[%s202 + $0x1c0] sm:$0xf] %vm2640, %v2496
      %2754 = vst.msk [vmem:[%s202 + $0x1c4] sm:$0xf] %vm2640, %v2497
      %2755 = vst.msk [vmem:[%s202 + $0x1c8] sm:$0xf] %vm2640, %v2498
      %2756 = vst.msk [vmem:[%s202 + $0x1cc] sm:$0xf] %vm2640, %v2499
      %2757 = vst.msk [vmem:[%s202 + $0x1d0] sm:$0xf] %vm2640, %v2500
      %2758 = vst.msk [vmem:[%s202 + $0x1d4] sm:$0xf] %vm2640, %v2501
      %2759 = vst.msk [vmem:[%s202 + $0x1d8] sm:$0xf] %vm2640, %v2502
      %2760 = vst.msk [vmem:[%s202 + $0x1dc] sm:$0xf] %vm2640, %v2503
      %2761 = vst.msk [vmem:[%s202 + $0x1e0] sm:$0xf] %vm2640, %v2504
      %2762 = vst.msk [vmem:[%s202 + $0x1e4] sm:$0xf] %vm2640, %v2505
      %2763 = vst.msk [vmem:[%s202 + $0x1e8] sm:$0xf] %vm2640, %v2506
      %2764 = vst.msk [vmem:[%s202 + $0x1ec] sm:$0xf] %vm2640, %v2507
      %2765 = vst.msk [vmem:[%s202 + $0x1f0] sm:$0xf] %vm2640, %v2508
      %2766 = vst.msk [vmem:[%s202 + $0x1f4] sm:$0xf] %vm2640, %v2509
      %2767 = vst.msk [vmem:[%s202 + $0x1f8] sm:$0xf] %vm2640, %v2510
      %2768 = vst.msk [vmem:[%s202 + $0x1fc] sm:$0xf] %vm2640, %v2511
      %s2769 = smul.u32 128, %s15
      %p2770 = scmp.lt.s32.totalorder %s2769, 255
      %s2771 = scalar_select %p2770, %s2769, 255
      %s2772 = smul.addr %s2771, 4
      %s2773 = scalar_lea.vmem %s4, %s2772
      // Predicated region
      $region37: #{tpu_custom_call.1} parent=35 // pred_check
        %p2774 = pneg %p122
      $region38: #{tpu_custom_call.1} parent=35 // pred_check_branch
        %2776 = sbr.rel (%p2774) target = $region40
      $region39: #{tpu_custom_call.1} parent=35 // pred_region
        %s2777 = smul.u32 128, %s15
      $region40: #{tpu_custom_call.1} parent=35 // pred_fallthru
        _
    $region36: #{tpu_custom_call.1} parent=5 // pred_fallthru
      _
    %p2778 = scmp.le.s32.totalorder 2, %s10
    // Predicated region
    $region41: #{tpu_custom_call.1} parent=5 // pred_check
      %p2779 = pneg %p2778
    $region42: #{tpu_custom_call.1} parent=5 // pred_check_branch
      %2781 = sbr.rel (%p2779) target = $region44
    $region43: #{tpu_custom_call.1} parent=5 // pred_region
      %s2782 = ssub.s32 %s10, 2
      // Predicated region
      $region45: #{tpu_custom_call.1} parent=43 // pred_check
        %p2783 = pneg %p128
      $region46: #{tpu_custom_call.1} parent=43 // pred_check_branch
        %2785 = sbr.rel (%p2783) target = $region48
      $region47: #{tpu_custom_call.1} parent=43 // pred_region
        %s2786 = smul.u32 128, %s16
        %p2787 = scmp.lt.s32.totalorder %s2786, 255
        %s2788 = scalar_select %p2787, %s2786, 255
        %s2789 = smul.addr %s2788, 4
        %s2790 = scalar_lea.vmem %s4, %s2789
      $region48: #{tpu_custom_call.1} parent=43 // pred_fallthru
        _
    $region44: #{tpu_custom_call.1} parent=5 // pred_fallthru
      _
  $region6: #{tpu_custom_call.1} parent=0 // loop_footer
    %s14 = sadd.s32 1, %s10
  $region7: #{tpu_custom_call.1} parent=0 // loop_footer_branch
    %9 = sbr.rel target = $region3
  $region8: #{tpu_custom_call.1} parent=0 // loop_exit
    _

</llo_original>
